<compile_context>
chip_gen: v6e
topology: v6e:2x2x1
jax: 0.10.0
libtpu: 0.0.40
codegen_flags: <defaults>
</compile_context>

<pallas_src>
import functools
import math

import jax
import jax.numpy as jnp
from jax.experimental import pallas as pl
from jax.experimental.pallas import tpu as pltpu


_TILE_BYTES_CAP = 1 << 20   # ~1 MiB input tile: saturates HBM roofline on v5e/v6e/v7x
_MIN_GRID_STEPS = 16        # >= 8 pipeline steps per TensorCore, even on dual-TC v7x


def _round_down(x: int, m: int) -> int:
    return (x // m) * m


def _sublane_multiple(dtype) -> int:
    # 8 rows for 32-bit, 16 for 16-bit, 32 for 8-bit dtypes.
    itemsize = jnp.dtype(dtype).itemsize
    return max(8, 32 // max(itemsize, 1))


def _layernorm_kernel(x_ref, g_ref, b_ref, o_ref, *, eps: float, d: int):
    """Standard path: one logical row per VMEM row; full-extent last dim (no lane pad)."""
    x = x_ref[...].astype(jnp.float32)                          # (TR, D)
    mean = jnp.sum(x, axis=-1, keepdims=True) * (1.0 / d)
    diff = x - mean
    var = jnp.sum(diff * diff, axis=-1, keepdims=True) * (1.0 / max(d - 1, 1))
    inv = jax.lax.rsqrt(var + eps)                              # EUP slot, off the VPU path
    g = g_ref[...].astype(jnp.float32)                          # (1, D)
    b = b_ref[...].astype(jnp.float32)
    o_ref[...] = (g * (diff * inv) + b).astype(o_ref.dtype)


def _layernorm_folded_kernel(x_ref, g_ref, b_ref, seg_ref, exp_ref, o_ref, *,
                             eps: float, d: int):
    """Tiny-D path: 128//D logical rows folded into each 128-lane row.

    Segmented mean/variance via tiny 0/1 indicator matmuls — the MXU is idle in this
    HBM-bound kernel, so they're free.  HIGHEST precision keeps the f32 matmuls exact
    to f32 rounding (no bf16 demotion).
    """
    hi = jax.lax.Precision.HIGHEST
    x = x_ref[...].astype(jnp.float32)                          # (TR, 128)
    seg_m = seg_ref[...]                                        # (128, FOLD) indicator
    exp_m = exp_ref[...]                                        # (FOLD, 128) indicator^T
    ssum = jnp.dot(x, seg_m, precision=hi, preferred_element_type=jnp.float32)   # (TR, FOLD)
    mean = jnp.dot(ssum, exp_m, precision=hi,
                   preferred_element_type=jnp.float32) * (1.0 / d)               # (TR, 128)
    diff = x - mean
    ssq = jnp.dot(diff * diff, seg_m, precision=hi, preferred_element_type=jnp.float32)
    var = jnp.dot(ssq, exp_m, precision=hi,
                  preferred_element_type=jnp.float32) * (1.0 / max(d - 1, 1))
    inv = jax.lax.rsqrt(var + eps)
    g = g_ref[...].astype(jnp.float32)                          # (1, 128): gamma tiled FOLD x
    b = b_ref[...].astype(jnp.float32)
    o_ref[...] = (g * (diff * inv) + b).astype(o_ref.dtype)


def _pick_row_tile(n_rows: int, row_bytes: int, sub: int) -> int:
    if n_rows <= sub:
        return n_rows                 # full-extent row block (legal per the (8,128) rule)
    tr = max(sub, _round_down(_TILE_BYTES_CAP // max(row_bytes, 1), sub))
    if n_rows >= _MIN_GRID_STEPS * sub:
        # Keep >= _MIN_GRID_STEPS grid steps so the pipeline has a steady state.
        tr = min(tr, max(sub, _round_down(n_rows // _MIN_GRID_STEPS, sub)))
    return min(tr, _round_down(n_rows, sub))


def layer_normalization(x: jax.Array, gamma: jax.Array, beta: jax.Array,
                        eps: float = 1e-6) -> jax.Array:
    """LayerNorm over the last dim of x. x: (..., D); gamma, beta: (D,)."""
    orig_shape = x.shape
    d = int(orig_shape[-1])
    rows = int(math.prod(orig_shape[:-1])) if len(orig_shape) > 1 else 1
    dtype = x.dtype
    itemsize = jnp.dtype(dtype).itemsize
    sub = _sublane_multiple(dtype)

    # Tiny-D folding: pack 128//D logical rows into one lane-dense 128-wide row.
    fold = 128 // d if (0 < d < 128 and 128 % d == 0) else 1
    use_fold = fold > 1 and rows > 0 and rows % fold == 0
    # TODO(synk): tiny-D shapes with rows % fold != 0 fall back to the narrow-lane path;
    # a remainder tile would recover the last bit of bandwidth for those ragged cases.

    seg = expand = None
    if use_fold:
        width = fold * d                                 # == 128
        n_rows = rows // fold
        x2 = x.reshape(n_rows, width)                    # contiguous reshape: free
        g2 = jnp.tile(gamma, fold).reshape(1, width)
        b2 = jnp.tile(beta, fold).reshape(1, width)
        lane = jnp.arange(width, dtype=jnp.int32)
        seg = (lane[:, None] // d ==
               jnp.arange(fold, dtype=jnp.int32)[None, :]).astype(jnp.float32)  # (128, fold)
        expand = jnp.transpose(seg)                                             # (fold, 128)
    else:
        width = d
        n_rows = rows
        x2 = x.reshape(n_rows, d)
        g2 = gamma.reshape(1, d)
        b2 = beta.reshape(1, d)

    tr = _pick_row_tile(n_rows, width * itemsize, sub)
    grid = (pl.cdiv(n_rows, tr),)

    # VMEM budget: double-buffered in/out tiles + ~4 f32 intermediates of the same
    # footprint (x.astype(f32), diff, squares, output staging) + gamma/beta/indicators.
    tile_in = tr * width * itemsize
    tile_f32 = tr * width * 4
    needed = 4 * tile_in + 4 * tile_f32 + 8 * width * 4 + (4 << 20)
    vmem_limit = int(min(128 << 20, max(needed, 32 << 20)))

    g_item = jnp.dtype(gamma.dtype).itemsize
    cost = pl.CostEstimate(
        flops=10 * rows * d,
        transcendentals=rows,
        bytes_accessed=2 * rows * d * itemsize + 2 * d * g_item,
    )

    x_spec = pl.BlockSpec((tr, width), lambda i: (i, 0))
    vec_spec = pl.BlockSpec((1, width), lambda i: (0, 0))

    if use_fold:
        kernel = functools.partial(_layernorm_folded_kernel, eps=float(eps), d=d)
        in_specs = [x_spec, vec_spec, vec_spec,
                    pl.BlockSpec((width, fold), lambda i: (0, 0)),
                    pl.BlockSpec((fold, width), lambda i: (0, 0))]
        args = (x2, g2, b2, seg, expand)
    else:
        kernel = functools.partial(_layernorm_kernel, eps=float(eps), d=d)
        in_specs = [x_spec, vec_spec, vec_spec]
        args = (x2, g2, b2)

    out2 = pl.pallas_call(
        kernel,
        out_shape=jax.ShapeDtypeStruct((n_rows, width), dtype),
        grid=grid,
        in_specs=in_specs,
        out_specs=x_spec,
        compiler_params=pltpu.CompilerParams(
            dimension_semantics=("parallel",),
            vmem_limit_bytes=vmem_limit,
        ),
        cost_estimate=cost,
    )(*args)

    return out2.reshape(orig_shape)


def _reference(x, gamma, beta, eps):
    mean = jnp.mean(x, axis=-1, keepdims=True)
    var = jnp.sum((x - mean) ** 2, axis=-1, keepdims=True) / max(x.shape[-1] - 1, 1)
    return gamma * (x - mean) / jnp.sqrt(var + eps) + beta


if __name__ == "__main__":
    key = jax.random.PRNGKey(0)
    kx, kg, kx2 = jax.random.split(key, 3)

    eps = 1e-6
    # Shapes implied by the transformer module: (batch, seq, hidden).
    batch, seq, hidden = 2, 8, 32
    x = jax.random.normal(kx, (batch, seq, hidden), dtype=jnp.float32)
    # Deterministic stand-in for the torch forward's init.uniform_(gamma, 0, 1).
    gamma = jax.random.uniform(kg, (hidden,), dtype=jnp.float32, minval=0.0, maxval=1.0)
    beta = jnp.zeros((hidden,), dtype=jnp.float32)

    out = jax.block_until_ready(layer_normalization(x, gamma, beta, eps=eps))
    ref = _reference(x, gamma, beta, eps)
    assert out.shape == x.shape and out.dtype == x.dtype
    # Folded (tiny-D) path; small headroom for MXU HIGHEST-precision f32 rounding.
    assert jnp.allclose(out, ref, atol=1e-4, rtol=1e-4)

    # Also exercise the standard path: D >= 128 / not foldable, ragged row count
    # (partial edge block), full-extent non-multiple-of-128 last dim.
    d2 = 160
    x_b = jax.random.normal(kx2, (3, 5, d2), dtype=jnp.float32)
    g_b = jnp.ones((d2,), dtype=jnp.float32)
    b_b = jnp.zeros((d2,), dtype=jnp.float32)
    out_b = jax.block_until_ready(layer_normalization(x_b, g_b, b_b, eps=eps))
    ref_b = _reference(x_b, g_b, b_b, eps)
    assert out_b.shape == x_b.shape and out_b.dtype == x_b.dtype
    assert jnp.allclose(out_b, ref_b, atol=1e-5, rtol=1e-5)

    print("KERNEL_OK")
</pallas_src>

<mosaic_0001>
module attributes {stable_mosaic.version = 11 : i64} {
  func.func @_layernorm_folded_kernel(%arg0: i32, %arg1: memref<4x128xf32, #tpu.memory_space<vmem>>, %arg2: memref<1x128xf32, #tpu.memory_space<vmem>>, %arg3: memref<1x128xf32, #tpu.memory_space<vmem>>, %arg4: memref<128x4xf32, #tpu.memory_space<vmem>>, %arg5: memref<4x128xf32, #tpu.memory_space<vmem>>, %arg6: memref<4x128xf32, #tpu.memory_space<vmem>>) attributes {dimension_semantics = [#tpu.dimension_semantics<parallel>], iteration_bounds = array<i64: 1>, scalar_prefetch = 0 : i64, scratch_operands = 0 : i64, tpu.core_type = #tpu.core_type<tc>, window_params = [{transform_indices = @transform_0, window_bounds = array<i64: 4, 128>}, {pipeline_mode = #tpu.pipeline_mode<synchronous>, transform_indices = @transform_1, window_bounds = array<i64: 1, 128>}, {pipeline_mode = #tpu.pipeline_mode<synchronous>, transform_indices = @transform_2, window_bounds = array<i64: 1, 128>}, {pipeline_mode = #tpu.pipeline_mode<synchronous>, transform_indices = @transform_3, window_bounds = array<i64: 128, 4>}, {pipeline_mode = #tpu.pipeline_mode<synchronous>, transform_indices = @transform_4, window_bounds = array<i64: 4, 128>}, {transform_indices = @transform_5, window_bounds = array<i64: 4, 128>}]} {
    %c0 = arith.constant 0 : index
    %c0_0 = arith.constant 0 : index
    %0 = vector.load %arg1[%c0, %c0_0] : memref<4x128xf32, #tpu.memory_space<vmem>>, vector<4x128xf32>
    %c0_1 = arith.constant 0 : index
    %c0_2 = arith.constant 0 : index
    %1 = vector.load %arg4[%c0_1, %c0_2] : memref<128x4xf32, #tpu.memory_space<vmem>>, vector<128x4xf32>
    %c0_3 = arith.constant 0 : index
    %c0_4 = arith.constant 0 : index
    %2 = vector.load %arg5[%c0_3, %c0_4] : memref<4x128xf32, #tpu.memory_space<vmem>>, vector<4x128xf32>
    %cst = arith.constant dense<0.000000e+00> : vector<4x4xf32>
    %3 = tpu.matmul %0, %1, %cst {dimension_numbers = #tpu.dot_dimension_numbers<[1], [0], [0], [1], [0, 0, 1, 1], [], []>, precision = #tpu.contract_precision<fp32>} : vector<4x128xf32>, vector<128x4xf32>, vector<4x4xf32> -> vector<4x4xf32>
    %cst_5 = arith.constant dense<0.000000e+00> : vector<4x128xf32>
    %4 = tpu.matmul %3, %2, %cst_5 {dimension_numbers = #tpu.dot_dimension_numbers<[1], [0], [0], [1], [0, 0, 1, 1], [], []>, precision = #tpu.contract_precision<fp32>} : vector<4x4xf32>, vector<4x128xf32>, vector<4x128xf32> -> vector<4x128xf32>
    %cst_6 = arith.constant 3.125000e-02 : f32
    %5 = vector.broadcast %cst_6 : f32 to vector<4x128xf32>
    %6 = arith.mulf %4, %5 : vector<4x128xf32>
    %7 = arith.subf %0, %6 : vector<4x128xf32>
    %8 = arith.mulf %7, %7 : vector<4x128xf32>
    %cst_7 = arith.constant dense<0.000000e+00> : vector<4x4xf32>
    %9 = tpu.matmul %8, %1, %cst_7 {dimension_numbers = #tpu.dot_dimension_numbers<[1], [0], [0], [1], [0, 0, 1, 1], [], []>, precision = #tpu.contract_precision<fp32>} : vector<4x128xf32>, vector<128x4xf32>, vector<4x4xf32> -> vector<4x4xf32>
    %cst_8 = arith.constant dense<0.000000e+00> : vector<4x128xf32>
    %10 = tpu.matmul %9, %2, %cst_8 {dimension_numbers = #tpu.dot_dimension_numbers<[1], [0], [0], [1], [0, 0, 1, 1], [], []>, precision = #tpu.contract_precision<fp32>} : vector<4x4xf32>, vector<4x128xf32>, vector<4x128xf32> -> vector<4x128xf32>
    %cst_9 = arith.constant 0.0322580636 : f32
    %11 = vector.broadcast %cst_9 : f32 to vector<4x128xf32>
    %12 = arith.mulf %10, %11 : vector<4x128xf32>
    %cst_10 = arith.constant 9.99999997E-7 : f32
    %13 = vector.broadcast %cst_10 : f32 to vector<4x128xf32>
    %14 = arith.addf %12, %13 : vector<4x128xf32>
    %15 = math.rsqrt %14 : vector<4x128xf32>
    %c0_11 = arith.constant 0 : index
    %c0_12 = arith.constant 0 : index
    %16 = vector.load %arg2[%c0_11, %c0_12] : memref<1x128xf32, #tpu.memory_space<vmem>>, vector<1x128xf32>
    %c0_13 = arith.constant 0 : index
    %c0_14 = arith.constant 0 : index
    %17 = vector.load %arg3[%c0_13, %c0_14] : memref<1x128xf32, #tpu.memory_space<vmem>>, vector<1x128xf32>
    %18 = arith.mulf %7, %15 : vector<4x128xf32>
    %19 = vector.broadcast %16 : vector<1x128xf32> to vector<4x128xf32>
    %20 = arith.mulf %19, %18 : vector<4x128xf32>
    %21 = vector.broadcast %17 : vector<1x128xf32> to vector<4x128xf32>
    %22 = arith.addf %20, %21 : vector<4x128xf32>
    %c0_15 = arith.constant 0 : index
    %c0_16 = arith.constant 0 : index
    %23 = vector.load %arg6[%c0_15, %c0_16] : memref<4x128xf32, #tpu.memory_space<vmem>>, vector<4x128xf32>
    tpu.vector_store %arg6[%c0_15, %c0_16], %22 {strides = array<i32>} : memref<4x128xf32, #tpu.memory_space<vmem>>, vector<4x128xf32>,
    return
  }
  func.func @transform_0(%arg0: i32) -> (i32, i32) {
    %c0_i32 = arith.constant 0 : i32
    %c0_i32_0 = arith.constant 0 : i32
    return %arg0, %c0_i32 : i32, i32
  }
  func.func @transform_1(%arg0: i32) -> (i32, i32) {
    %c0_i32 = arith.constant 0 : i32
    %c0_i32_0 = arith.constant 0 : i32
    %c0_i32_1 = arith.constant 0 : i32
    return %c0_i32, %c0_i32_0 : i32, i32
  }
  func.func @transform_2(%arg0: i32) -> (i32, i32) {
    %c0_i32 = arith.constant 0 : i32
    %c0_i32_0 = arith.constant 0 : i32
    %c0_i32_1 = arith.constant 0 : i32
    return %c0_i32, %c0_i32_0 : i32, i32
  }
  func.func @transform_3(%arg0: i32) -> (i32, i32) {
    %c0_i32 = arith.constant 0 : i32
    %c0_i32_0 = arith.constant 0 : i32
    %c0_i32_1 = arith.constant 0 : i32
    return %c0_i32, %c0_i32_0 : i32, i32
  }
  func.func @transform_4(%arg0: i32) -> (i32, i32) {
    %c0_i32 = arith.constant 0 : i32
    %c0_i32_0 = arith.constant 0 : i32
    %c0_i32_1 = arith.constant 0 : i32
    return %c0_i32, %c0_i32_0 : i32, i32
  }
  func.func @transform_5(%arg0: i32) -> (i32, i32) {
    %c0_i32 = arith.constant 0 : i32
    %c0_i32_0 = arith.constant 0 : i32
    return %arg0, %c0_i32 : i32, i32
  }
}

</mosaic_0001>

<llo_original>
// kernel: tpu_custom_call.1
$region0: #{tpu_custom_call.1}
  #allocation0 [shape = 'u32[]', space=smem, size = 0x4, offset = 0x4, fixed_abs, tag = 'smem constant byte address 0x4 - core index']
  #allocation1 [shape = 'u32[144,128]{1,0:T(1,128)}', space=vmem, size = 0x12000, scoped, tag = 'internal scratch']
  %s0 = inlined_call_operand.vmem [shape: f32[4,128], index: 0, kind: input, shape index: {}]
  %s1 = inlined_call_operand.vmem [shape: f32[1,128], index: 1, kind: input, shape index: {}]
  %s2 = inlined_call_operand.vmem [shape: f32[1,128], index: 2, kind: input, shape index: {}]
  %s3 = inlined_call_operand.vmem [shape: f32[128,4], index: 3, kind: input, shape index: {}]
  %s4 = inlined_call_operand.vmem [shape: f32[4,128], index: 4, kind: input, shape index: {}]
  %s5 = inlined_call_operand.hbm [shape: f32[4,128], index: 5, kind: output, shape index: {}]
  %s6 = sld [smem:[#allocation0]]
  $region30: #{tpu_custom_call.1} parent=0
    _
  %s8 = ssub.s32 1, %s6
  %s9 = scalar_select 0, %s8, %s6
  $region1: #{tpu_custom_call.1} parent=0
    #allocation2 [shape = 'u8[2048]{0}', space=vmem, size = 0x800, scoped, tag = 'output window, operand 0, single buffered']
    #allocation3 [shape = 's32[1]{0}', space=sflag, size = 0x4, scoped, tag = 'scoped memory for tpu_custom_call.1']
    %10 = vsyncpa [#allocation3], 0
    // Predicated region
    $region2: #{tpu_custom_call.1} parent=1 // pred_check
      _
    $region3: #{tpu_custom_call.1} parent=1 // pred_check_branch
      %12 = sbr.rel (0) target = $region5
    $region4: #{tpu_custom_call.1} parent=1 // pred_region
      _
    $region5: #{tpu_custom_call.1} parent=1 // pred_fallthru
      _
    // Predicated region
    $region6: #{tpu_custom_call.1} parent=1 // pred_check
      _
    $region7: #{tpu_custom_call.1} parent=1 // pred_check_branch
      %14 = sbr.rel (0) target = $region9
    $region8: #{tpu_custom_call.1} parent=1 // pred_region
      _
    $region9: #{tpu_custom_call.1} parent=1 // pred_fallthru
      _
    // Predicated region
    $region10: #{tpu_custom_call.1} parent=1 // pred_check
      _
    $region11: #{tpu_custom_call.1} parent=1 // pred_check_branch
      %16 = sbr.rel (0) target = $region13
    $region12: #{tpu_custom_call.1} parent=1 // pred_region
      _
    $region13: #{tpu_custom_call.1} parent=1 // pred_fallthru
      _
    // Predicated region
    $region14: #{tpu_custom_call.1} parent=1 // pred_check
      _
    $region15: #{tpu_custom_call.1} parent=1 // pred_check_branch
      %18 = sbr.rel (0) target = $region17
    $region16: #{tpu_custom_call.1} parent=1 // pred_region
      _
    $region17: #{tpu_custom_call.1} parent=1 // pred_fallthru
      _
    // Predicated region
    $region18: #{tpu_custom_call.1} parent=1 // pred_check
      _
    $region19: #{tpu_custom_call.1} parent=1 // pred_check_branch
      %20 = sbr.rel (0) target = $region21
    $region20: #{tpu_custom_call.1} parent=1 // pred_region
      _
    $region21: #{tpu_custom_call.1} parent=1 // pred_fallthru
      _
    %v21 = vld [vmem:[%s0] sm:$0xf]
    %v22 = vld [vmem:[%s3] sm:$0xff]
    %v23 = vld [vmem:[%s3 + $0x8] sm:$0xff]
    %v24 = vld [vmem:[%s3 + $0x10] sm:$0xff]
    %v25 = vld [vmem:[%s3 + $0x18] sm:$0xff]
    %v26 = vld [vmem:[%s3 + $0x20] sm:$0xff]
    %v27 = vld [vmem:[%s3 + $0x28] sm:$0xff]
    %v28 = vld [vmem:[%s3 + $0x30] sm:$0xff]
    %v29 = vld [vmem:[%s3 + $0x38] sm:$0xff]
    %v30 = vld [vmem:[%s3 + $0x40] sm:$0xff]
    %v31 = vld [vmem:[%s3 + $0x48] sm:$0xff]
    %v32 = vld [vmem:[%s3 + $0x50] sm:$0xff]
    %v33 = vld [vmem:[%s3 + $0x58] sm:$0xff]
    %v34 = vld [vmem:[%s3 + $0x60] sm:$0xff]
    %v35 = vld [vmem:[%s3 + $0x68] sm:$0xff]
    %v36 = vld [vmem:[%s3 + $0x70] sm:$0xff]
    %v37 = vld [vmem:[%s3 + $0x78] sm:$0xff]
    %v38 = vld [vmem:[%s4] sm:$0xf]
    %39 = vmatprep.subr.mxu0 0.0
    %v40 = vand.u32 %v37, 4294901760
    %41 = vmatpush1.msra.mxu0 %v40
    %42 = vmatprep.subr.mxu0 0.0
    %v43 = vand.u32 %v36, 4294901760
    %44 = vmatpush1.msra.mxu0 %v43
    %45 = vmatprep.subr.mxu0 0.0
    %v46 = vand.u32 %v35, 4294901760
    %47 = vmatpush1.msra.mxu0 %v46
    %48 = vmatprep.subr.mxu0 0.0
    %v49 = vand.u32 %v34, 4294901760
    %50 = vmatpush1.msra.mxu0 %v49
    %51 = vmatprep.subr.mxu0 0.0
    %v52 = vand.u32 %v33, 4294901760
    %53 = vmatpush1.msra.mxu0 %v52
    %54 = vmatprep.subr.mxu0 0.0
    %v55 = vand.u32 %v32, 4294901760
    %56 = vmatpush1.msra.mxu0 %v55
    %57 = vmatprep.subr.mxu0 0.0
    %v58 = vand.u32 %v31, 4294901760
    %59 = vmatpush1.msra.mxu0 %v58
    %60 = vmatprep.subr.mxu0 0.0
    %v61 = vand.u32 %v30, 4294901760
    %62 = vmatpush1.msra.mxu0 %v61
    %63 = vmatprep.subr.mxu0 0.0
    %v64 = vand.u32 %v29, 4294901760
    %65 = vmatpush1.msra.mxu0 %v64
    %66 = vmatprep.subr.mxu0 0.0
    %v67 = vand.u32 %v28, 4294901760
    %68 = vmatpush1.msra.mxu0 %v67
    %69 = vmatprep.subr.mxu0 0.0
    %v70 = vand.u32 %v27, 4294901760
    %71 = vmatpush1.msra.mxu0 %v70
    %72 = vmatprep.subr.mxu0 0.0
    %v73 = vand.u32 %v26, 4294901760
    %74 = vmatpush1.msra.mxu0 %v73
    %75 = vmatprep.subr.mxu0 0.0
    %v76 = vand.u32 %v25, 4294901760
    %77 = vmatpush1.msra.mxu0 %v76
    %78 = vmatprep.subr.mxu0 0.0
    %v79 = vand.u32 %v24, 4294901760
    %80 = vmatpush1.msra.mxu0 %v79
    %81 = vmatprep.subr.mxu0 0.0
    %v82 = vand.u32 %v23, 4294901760
    %83 = vmatpush1.msra.mxu0 %v82
    %84 = vmatprep.subr.mxu0 0.0
    %v85 = vand.u32 %v22, 4294901760
    %86 = vmatpush1.msra.mxu0 %v85
    %87 = vmatprep.subr.mxu0 0.0
    %88 = vmatpush2.msra.mxu0 0.0
    %89 = vmatprep.subr.mxu0 0.0
    %90 = vmatpush2.msra.mxu0 0.0
    %91 = vmatprep.subr.mxu0 0.0
    %92 = vmatpush2.msra.mxu0 0.0
    %93 = vmatprep.subr.mxu0 0.0
    %94 = vmatpush2.msra.mxu0 0.0
    %95 = vmatprep.subr.mxu0 0.0
    %96 = vmatpush2.msra.mxu0 0.0
    %97 = vmatprep.subr.mxu0 0.0
    %98 = vmatpush2.msra.mxu0 0.0
    %99 = vmatprep.subr.mxu0 0.0
    %100 = vmatpush2.msra.mxu0 0.0
    %101 = vmatprep.subr.mxu0 0.0
    %102 = vmatpush2.msra.mxu0 0.0
    %103 = vmatprep.subr.mxu0 0.0
    %104 = vmatpush2.msra.mxu0 0.0
    %105 = vmatprep.subr.mxu0 0.0
    %106 = vmatpush2.msra.mxu0 0.0
    %107 = vmatprep.subr.mxu0 0.0
    %108 = vmatpush2.msra.mxu0 0.0
    %109 = vmatprep.subr.mxu0 0.0
    %110 = vmatpush2.msra.mxu0 0.0
    %111 = vmatprep.subr.mxu0 0.0
    %112 = vmatpush2.msra.mxu0 0.0
    %113 = vmatprep.subr.mxu0 0.0
    %114 = vmatpush2.msra.mxu0 0.0
    %115 = vmatprep.subr.mxu0 0.0
    %116 = vmatpush2.msra.mxu0 0.0
    %117 = vmatprep.subr.mxu0 0.0
    %118 = vmatpush2.msra.mxu0 0.0
    %119 = vmatprep.mubr.f32.mxu0 0.0
    %v120 = vand.u32 %v21, 4294901760
    %v121 = vsub.f32 %v21, %v120
    %v122 = vand.u32 %v121, 4294901760
    %v123 = vsub.f32 %v121, %v122
    %v124 = vand.u32 %v123, 4294901760
    %125 = vmatmul.mubr.f32.gmra.mxu0 %v124
    %v126 = vpop.f32.mrf.mxu0
    %v127 = vadd.f32 0.0, %v126
    %v128 = vpop.f32.mrf.mxu0
    %129 = vdwg.mxu0
    %130 = vmatprep.subr.mxu0 0.0
    %v131 = vand.u32 %v37, 4294901760
    %v132 = vsub.f32 %v37, %v131
    %v133 = vand.u32 %v132, 4294901760
    %v134 = vsub.f32 %v132, %v133
    %v135 = vand.u32 %v134, 4294901760
    %136 = vmatpush1.msra.mxu0 %v135
    %137 = vmatprep.subr.mxu0 0.0
    %v138 = vand.u32 %v36, 4294901760
    %v139 = vsub.f32 %v36, %v138
    %v140 = vand.u32 %v139, 4294901760
    %v141 = vsub.f32 %v139, %v140
    %v142 = vand.u32 %v141, 4294901760
    %143 = vmatpush1.msra.mxu0 %v142
    %144 = vmatprep.subr.mxu0 0.0
    %v145 = vand.u32 %v35, 4294901760
    %v146 = vsub.f32 %v35, %v145
    %v147 = vand.u32 %v146, 4294901760
    %v148 = vsub.f32 %v146, %v147
    %v149 = vand.u32 %v148, 4294901760
    %150 = vmatpush1.msra.mxu0 %v149
    %151 = vmatprep.subr.mxu0 0.0
    %v152 = vand.u32 %v34, 4294901760
    %v153 = vsub.f32 %v34, %v152
    %v154 = vand.u32 %v153, 4294901760
    %v155 = vsub.f32 %v153, %v154
    %v156 = vand.u32 %v155, 4294901760
    %157 = vmatpush1.msra.mxu0 %v156
    %158 = vmatprep.subr.mxu0 0.0
    %v159 = vand.u32 %v33, 4294901760
    %v160 = vsub.f32 %v33, %v159
    %v161 = vand.u32 %v160, 4294901760
    %v162 = vsub.f32 %v160, %v161
    %v163 = vand.u32 %v162, 4294901760
    %164 = vmatpush1.msra.mxu0 %v163
    %165 = vmatprep.subr.mxu0 0.0
    %v166 = vand.u32 %v32, 4294901760
    %v167 = vsub.f32 %v32, %v166
    %v168 = vand.u32 %v167, 4294901760
    %v169 = vsub.f32 %v167, %v168
    %v170 = vand.u32 %v169, 4294901760
    %171 = vmatpush1.msra.mxu0 %v170
    %172 = vmatprep.subr.mxu0 0.0
    %v173 = vand.u32 %v31, 4294901760
    %v174 = vsub.f32 %v31, %v173
    %v175 = vand.u32 %v174, 4294901760
    %v176 = vsub.f32 %v174, %v175
    %v177 = vand.u32 %v176, 4294901760
    %178 = vmatpush1.msra.mxu0 %v177
    %179 = vmatprep.subr.mxu0 0.0
    %v180 = vand.u32 %v30, 4294901760
    %v181 = vsub.f32 %v30, %v180
    %v182 = vand.u32 %v181, 4294901760
    %v183 = vsub.f32 %v181, %v182
    %v184 = vand.u32 %v183, 4294901760
    %185 = vmatpush1.msra.mxu0 %v184
    %186 = vmatprep.subr.mxu0 0.0
    %v187 = vand.u32 %v29, 4294901760
    %v188 = vsub.f32 %v29, %v187
    %v189 = vand.u32 %v188, 4294901760
    %v190 = vsub.f32 %v188, %v189
    %v191 = vand.u32 %v190, 4294901760
    %192 = vmatpush1.msra.mxu0 %v191
    %193 = vmatprep.subr.mxu0 0.0
    %v194 = vand.u32 %v28, 4294901760
    %v195 = vsub.f32 %v28, %v194
    %v196 = vand.u32 %v195, 4294901760
    %v197 = vsub.f32 %v195, %v196
    %v198 = vand.u32 %v197, 4294901760
    %199 = vmatpush1.msra.mxu0 %v198
    %200 = vmatprep.subr.mxu0 0.0
    %v201 = vand.u32 %v27, 4294901760
    %v202 = vsub.f32 %v27, %v201
    %v203 = vand.u32 %v202, 4294901760
    %v204 = vsub.f32 %v202, %v203
    %v205 = vand.u32 %v204, 4294901760
    %206 = vmatpush1.msra.mxu0 %v205
    %207 = vmatprep.subr.mxu0 0.0
    %v208 = vand.u32 %v26, 4294901760
    %v209 = vsub.f32 %v26, %v208
    %v210 = vand.u32 %v209, 4294901760
    %v211 = vsub.f32 %v209, %v210
    %v212 = vand.u32 %v211, 4294901760
    %213 = vmatpush1.msra.mxu0 %v212
    %214 = vmatprep.subr.mxu0 0.0
    %v215 = vand.u32 %v25, 4294901760
    %v216 = vsub.f32 %v25, %v215
    %v217 = vand.u32 %v216, 4294901760
    %v218 = vsub.f32 %v216, %v217
    %v219 = vand.u32 %v218, 4294901760
    %220 = vmatpush1.msra.mxu0 %v219
    %221 = vmatprep.subr.mxu0 0.0
    %v222 = vand.u32 %v24, 4294901760
    %v223 = vsub.f32 %v24, %v222
    %v224 = vand.u32 %v223, 4294901760
    %v225 = vsub.f32 %v223, %v224
    %v226 = vand.u32 %v225, 4294901760
    %227 = vmatpush1.msra.mxu0 %v226
    %228 = vmatprep.subr.mxu0 0.0
    %v229 = vand.u32 %v23, 4294901760
    %v230 = vsub.f32 %v23, %v229
    %v231 = vand.u32 %v230, 4294901760
    %v232 = vsub.f32 %v230, %v231
    %v233 = vand.u32 %v232, 4294901760
    %234 = vmatpush1.msra.mxu0 %v233
    %235 = vmatprep.subr.mxu0 0.0
    %v236 = vand.u32 %v22, 4294901760
    %v237 = vsub.f32 %v22, %v236
    %v238 = vand.u32 %v237, 4294901760
    %v239 = vsub.f32 %v237, %v238
    %v240 = vand.u32 %v239, 4294901760
    %241 = vmatpush1.msra.mxu0 %v240
    %242 = vmatprep.subr.mxu0 0.0
    %243 = vmatpush2.msra.mxu0 0.0
    %244 = vmatprep.subr.mxu0 0.0
    %245 = vmatpush2.msra.mxu0 0.0
    %246 = vmatprep.subr.mxu0 0.0
    %247 = vmatpush2.msra.mxu0 0.0
    %248 = vmatprep.subr.mxu0 0.0
    %249 = vmatpush2.msra.mxu0 0.0
    %250 = vmatprep.subr.mxu0 0.0
    %251 = vmatpush2.msra.mxu0 0.0
    %252 = vmatprep.subr.mxu0 0.0
    %253 = vmatpush2.msra.mxu0 0.0
    %254 = vmatprep.subr.mxu0 0.0
    %255 = vmatpush2.msra.mxu0 0.0
    %256 = vmatprep.subr.mxu0 0.0
    %257 = vmatpush2.msra.mxu0 0.0
    %258 = vmatprep.subr.mxu0 0.0
    %259 = vmatpush2.msra.mxu0 0.0
    %260 = vmatprep.subr.mxu0 0.0
    %261 = vmatpush2.msra.mxu0 0.0
    %262 = vmatprep.subr.mxu0 0.0
    %263 = vmatpush2.msra.mxu0 0.0
    %264 = vmatprep.subr.mxu0 0.0
    %265 = vmatpush2.msra.mxu0 0.0
    %266 = vmatprep.subr.mxu0 0.0
    %267 = vmatpush2.msra.mxu0 0.0
    %268 = vmatprep.subr.mxu0 0.0
    %269 = vmatpush2.msra.mxu0 0.0
    %270 = vmatprep.subr.mxu0 0.0
    %271 = vmatpush2.msra.mxu0 0.0
    %272 = vmatprep.subr.mxu0 0.0
    %273 = vmatpush2.msra.mxu0 0.0
    %274 = vmatprep.mubr.f32.mxu0 0.0
    %v275 = vand.u32 %v21, 4294901760
    %276 = vmatmul.mubr.f32.gmra.mxu0 %v275
    %v277 = vpop.f32.mrf.mxu0
    %v278 = vadd.f32 %v127, %v277
    %v279 = vpop.f32.mrf.mxu0
    %280 = vdwg.mxu0
    %281 = vmatprep.subr.mxu0 0.0
    %v282 = vand.u32 %v37, 4294901760
    %v283 = vsub.f32 %v37, %v282
    %284 = vmatpush1.msra.mxu0 %v283
    %285 = vmatprep.subr.mxu0 0.0
    %v286 = vand.u32 %v36, 4294901760
    %v287 = vsub.f32 %v36, %v286
    %288 = vmatpush1.msra.mxu0 %v287
    %289 = vmatprep.subr.mxu0 0.0
    %v290 = vand.u32 %v35, 4294901760
    %v291 = vsub.f32 %v35, %v290
    %292 = vmatpush1.msra.mxu0 %v291
    %293 = vmatprep.subr.mxu0 0.0
    %v294 = vand.u32 %v34, 4294901760
    %v295 = vsub.f32 %v34, %v294
    %296 = vmatpush1.msra.mxu0 %v295
    %297 = vmatprep.subr.mxu0 0.0
    %v298 = vand.u32 %v33, 4294901760
    %v299 = vsub.f32 %v33, %v298
    %300 = vmatpush1.msra.mxu0 %v299
    %301 = vmatprep.subr.mxu0 0.0
    %v302 = vand.u32 %v32, 4294901760
    %v303 = vsub.f32 %v32, %v302
    %304 = vmatpush1.msra.mxu0 %v303
    %305 = vmatprep.subr.mxu0 0.0
    %v306 = vand.u32 %v31, 4294901760
    %v307 = vsub.f32 %v31, %v306
    %308 = vmatpush1.msra.mxu0 %v307
    %309 = vmatprep.subr.mxu0 0.0
    %v310 = vand.u32 %v30, 4294901760
    %v311 = vsub.f32 %v30, %v310
    %312 = vmatpush1.msra.mxu0 %v311
    %313 = vmatprep.subr.mxu0 0.0
    %v314 = vand.u32 %v29, 4294901760
    %v315 = vsub.f32 %v29, %v314
    %316 = vmatpush1.msra.mxu0 %v315
    %317 = vmatprep.subr.mxu0 0.0
    %v318 = vand.u32 %v28, 4294901760
    %v319 = vsub.f32 %v28, %v318
    %320 = vmatpush1.msra.mxu0 %v319
    %321 = vmatprep.subr.mxu0 0.0
    %v322 = vand.u32 %v27, 4294901760
    %v323 = vsub.f32 %v27, %v322
    %324 = vmatpush1.msra.mxu0 %v323
    %325 = vmatprep.subr.mxu0 0.0
    %v326 = vand.u32 %v26, 4294901760
    %v327 = vsub.f32 %v26, %v326
    %328 = vmatpush1.msra.mxu0 %v327
    %329 = vmatprep.subr.mxu0 0.0
    %v330 = vand.u32 %v25, 4294901760
    %v331 = vsub.f32 %v25, %v330
    %332 = vmatpush1.msra.mxu0 %v331
    %333 = vmatprep.subr.mxu0 0.0
    %v334 = vand.u32 %v24, 4294901760
    %v335 = vsub.f32 %v24, %v334
    %336 = vmatpush1.msra.mxu0 %v335
    %337 = vmatprep.subr.mxu0 0.0
    %v338 = vand.u32 %v23, 4294901760
    %v339 = vsub.f32 %v23, %v338
    %340 = vmatpush1.msra.mxu0 %v339
    %341 = vmatprep.subr.mxu0 0.0
    %v342 = vand.u32 %v22, 4294901760
    %v343 = vsub.f32 %v22, %v342
    %344 = vmatpush1.msra.mxu0 %v343
    %345 = vmatprep.subr.mxu0 0.0
    %346 = vmatpush2.msra.mxu0 0.0
    %347 = vmatprep.subr.mxu0 0.0
    %348 = vmatpush2.msra.mxu0 0.0
    %349 = vmatprep.subr.mxu0 0.0
    %350 = vmatpush2.msra.mxu0 0.0
    %351 = vmatprep.subr.mxu0 0.0
    %352 = vmatpush2.msra.mxu0 0.0
    %353 = vmatprep.subr.mxu0 0.0
    %354 = vmatpush2.msra.mxu0 0.0
    %355 = vmatprep.subr.mxu0 0.0
    %356 = vmatpush2.msra.mxu0 0.0
    %357 = vmatprep.subr.mxu0 0.0
    %358 = vmatpush2.msra.mxu0 0.0
    %359 = vmatprep.subr.mxu0 0.0
    %360 = vmatpush2.msra.mxu0 0.0
    %361 = vmatprep.subr.mxu0 0.0
    %362 = vmatpush2.msra.mxu0 0.0
    %363 = vmatprep.subr.mxu0 0.0
    %364 = vmatpush2.msra.mxu0 0.0
    %365 = vmatprep.subr.mxu0 0.0
    %366 = vmatpush2.msra.mxu0 0.0
    %367 = vmatprep.subr.mxu0 0.0
    %368 = vmatpush2.msra.mxu0 0.0
    %369 = vmatprep.subr.mxu0 0.0
    %370 = vmatpush2.msra.mxu0 0.0
    %371 = vmatprep.subr.mxu0 0.0
    %372 = vmatpush2.msra.mxu0 0.0
    %373 = vmatprep.subr.mxu0 0.0
    %374 = vmatpush2.msra.mxu0 0.0
    %375 = vmatprep.subr.mxu0 0.0
    %376 = vmatpush2.msra.mxu0 0.0
    %377 = vmatprep.mubr.f32.mxu0 0.0
    %v378 = vand.u32 %v21, 4294901760
    %v379 = vsub.f32 %v21, %v378
    %380 = vmatmul.mubr.f32.gmra.mxu0 %v379
    %v381 = vpop.f32.mrf.mxu0
    %v382 = vadd.f32 %v278, %v381
    %v383 = vpop.f32.mrf.mxu0
    %384 = vdwg.mxu0
    %385 = vmatprep.subr.mxu0 0.0
    %v386 = vand.u32 %v37, 4294901760
    %387 = vmatpush1.msra.mxu0 %v386
    %388 = vmatprep.subr.mxu0 0.0
    %v389 = vand.u32 %v36, 4294901760
    %390 = vmatpush1.msra.mxu0 %v389
    %391 = vmatprep.subr.mxu0 0.0
    %v392 = vand.u32 %v35, 4294901760
    %393 = vmatpush1.msra.mxu0 %v392
    %394 = vmatprep.subr.mxu0 0.0
    %v395 = vand.u32 %v34, 4294901760
    %396 = vmatpush1.msra.mxu0 %v395
    %397 = vmatprep.subr.mxu0 0.0
    %v398 = vand.u32 %v33, 4294901760
    %399 = vmatpush1.msra.mxu0 %v398
    %400 = vmatprep.subr.mxu0 0.0
    %v401 = vand.u32 %v32, 4294901760
    %402 = vmatpush1.msra.mxu0 %v401
    %403 = vmatprep.subr.mxu0 0.0
    %v404 = vand.u32 %v31, 4294901760
    %405 = vmatpush1.msra.mxu0 %v404
    %406 = vmatprep.subr.mxu0 0.0
    %v407 = vand.u32 %v30, 4294901760
    %408 = vmatpush1.msra.mxu0 %v407
    %409 = vmatprep.subr.mxu0 0.0
    %v410 = vand.u32 %v29, 4294901760
    %411 = vmatpush1.msra.mxu0 %v410
    %412 = vmatprep.subr.mxu0 0.0
    %v413 = vand.u32 %v28, 4294901760
    %414 = vmatpush1.msra.mxu0 %v413
    %415 = vmatprep.subr.mxu0 0.0
    %v416 = vand.u32 %v27, 4294901760
    %417 = vmatpush1.msra.mxu0 %v416
    %418 = vmatprep.subr.mxu0 0.0
    %v419 = vand.u32 %v26, 4294901760
    %420 = vmatpush1.msra.mxu0 %v419
    %421 = vmatprep.subr.mxu0 0.0
    %v422 = vand.u32 %v25, 4294901760
    %423 = vmatpush1.msra.mxu0 %v422
    %424 = vmatprep.subr.mxu0 0.0
    %v425 = vand.u32 %v24, 4294901760
    %426 = vmatpush1.msra.mxu0 %v425
    %427 = vmatprep.subr.mxu0 0.0
    %v428 = vand.u32 %v23, 4294901760
    %429 = vmatpush1.msra.mxu0 %v428
    %430 = vmatprep.subr.mxu0 0.0
    %v431 = vand.u32 %v22, 4294901760
    %432 = vmatpush1.msra.mxu0 %v431
    %433 = vmatprep.subr.mxu0 0.0
    %434 = vmatpush2.msra.mxu0 0.0
    %435 = vmatprep.subr.mxu0 0.0
    %436 = vmatpush2.msra.mxu0 0.0
    %437 = vmatprep.subr.mxu0 0.0
    %438 = vmatpush2.msra.mxu0 0.0
    %439 = vmatprep.subr.mxu0 0.0
    %440 = vmatpush2.msra.mxu0 0.0
    %441 = vmatprep.subr.mxu0 0.0
    %442 = vmatpush2.msra.mxu0 0.0
    %443 = vmatprep.subr.mxu0 0.0
    %444 = vmatpush2.msra.mxu0 0.0
    %445 = vmatprep.subr.mxu0 0.0
    %446 = vmatpush2.msra.mxu0 0.0
    %447 = vmatprep.subr.mxu0 0.0
    %448 = vmatpush2.msra.mxu0 0.0
    %449 = vmatprep.subr.mxu0 0.0
    %450 = vmatpush2.msra.mxu0 0.0
    %451 = vmatprep.subr.mxu0 0.0
    %452 = vmatpush2.msra.mxu0 0.0
    %453 = vmatprep.subr.mxu0 0.0
    %454 = vmatpush2.msra.mxu0 0.0
    %455 = vmatprep.subr.mxu0 0.0
    %456 = vmatpush2.msra.mxu0 0.0
    %457 = vmatprep.subr.mxu0 0.0
    %458 = vmatpush2.msra.mxu0 0.0
    %459 = vmatprep.subr.mxu0 0.0
    %460 = vmatpush2.msra.mxu0 0.0
    %461 = vmatprep.subr.mxu0 0.0
    %462 = vmatpush2.msra.mxu0 0.0
    %463 = vmatprep.subr.mxu0 0.0
    %464 = vmatpush2.msra.mxu0 0.0
    %465 = vmatprep.mubr.f32.mxu0 0.0
    %v466 = vand.u32 %v21, 4294901760
    %v467 = vsub.f32 %v21, %v466
    %v468 = vand.u32 %v467, 4294901760
    %469 = vmatmul.mubr.f32.gmra.mxu0 %v468
    %v470 = vpop.f32.mrf.mxu0
    %v471 = vadd.f32 %v382, %v470
    %v472 = vpop.f32.mrf.mxu0
    %473 = vdwg.mxu0
    %474 = vmatprep.subr.mxu0 0.0
    %v475 = vand.u32 %v37, 4294901760
    %v476 = vsub.f32 %v37, %v475
    %v477 = vand.u32 %v476, 4294901760
    %478 = vmatpush1.msra.mxu0 %v477
    %479 = vmatprep.subr.mxu0 0.0
    %v480 = vand.u32 %v36, 4294901760
    %v481 = vsub.f32 %v36, %v480
    %v482 = vand.u32 %v481, 4294901760
    %483 = vmatpush1.msra.mxu0 %v482
    %484 = vmatprep.subr.mxu0 0.0
    %v485 = vand.u32 %v35, 4294901760
    %v486 = vsub.f32 %v35, %v485
    %v487 = vand.u32 %v486, 4294901760
    %488 = vmatpush1.msra.mxu0 %v487
    %489 = vmatprep.subr.mxu0 0.0
    %v490 = vand.u32 %v34, 4294901760
    %v491 = vsub.f32 %v34, %v490
    %v492 = vand.u32 %v491, 4294901760
    %493 = vmatpush1.msra.mxu0 %v492
    %494 = vmatprep.subr.mxu0 0.0
    %v495 = vand.u32 %v33, 4294901760
    %v496 = vsub.f32 %v33, %v495
    %v497 = vand.u32 %v496, 4294901760
    %498 = vmatpush1.msra.mxu0 %v497
    %499 = vmatprep.subr.mxu0 0.0
    %v500 = vand.u32 %v32, 4294901760
    %v501 = vsub.f32 %v32, %v500
    %v502 = vand.u32 %v501, 4294901760
    %503 = vmatpush1.msra.mxu0 %v502
    %504 = vmatprep.subr.mxu0 0.0
    %v505 = vand.u32 %v31, 4294901760
    %v506 = vsub.f32 %v31, %v505
    %v507 = vand.u32 %v506, 4294901760
    %508 = vmatpush1.msra.mxu0 %v507
    %509 = vmatprep.subr.mxu0 0.0
    %v510 = vand.u32 %v30, 4294901760
    %v511 = vsub.f32 %v30, %v510
    %v512 = vand.u32 %v511, 4294901760
    %513 = vmatpush1.msra.mxu0 %v512
    %514 = vmatprep.subr.mxu0 0.0
    %v515 = vand.u32 %v29, 4294901760
    %v516 = vsub.f32 %v29, %v515
    %v517 = vand.u32 %v516, 4294901760
    %518 = vmatpush1.msra.mxu0 %v517
    %519 = vmatprep.subr.mxu0 0.0
    %v520 = vand.u32 %v28, 4294901760
    %v521 = vsub.f32 %v28, %v520
    %v522 = vand.u32 %v521, 4294901760
    %523 = vmatpush1.msra.mxu0 %v522
    %524 = vmatprep.subr.mxu0 0.0
    %v525 = vand.u32 %v27, 4294901760
    %v526 = vsub.f32 %v27, %v525
    %v527 = vand.u32 %v526, 4294901760
    %528 = vmatpush1.msra.mxu0 %v527
    %529 = vmatprep.subr.mxu0 0.0
    %v530 = vand.u32 %v26, 4294901760
    %v531 = vsub.f32 %v26, %v530
    %v532 = vand.u32 %v531, 4294901760
    %533 = vmatpush1.msra.mxu0 %v532
    %534 = vmatprep.subr.mxu0 0.0
    %v535 = vand.u32 %v25, 4294901760
    %v536 = vsub.f32 %v25, %v535
    %v537 = vand.u32 %v536, 4294901760
    %538 = vmatpush1.msra.mxu0 %v537
    %539 = vmatprep.subr.mxu0 0.0
    %v540 = vand.u32 %v24, 4294901760
    %v541 = vsub.f32 %v24, %v540
    %v542 = vand.u32 %v541, 4294901760
    %543 = vmatpush1.msra.mxu0 %v542
    %544 = vmatprep.subr.mxu0 0.0
    %v545 = vand.u32 %v23, 4294901760
    %v546 = vsub.f32 %v23, %v545
    %v547 = vand.u32 %v546, 4294901760
    %548 = vmatpush1.msra.mxu0 %v547
    %549 = vmatprep.subr.mxu0 0.0
    %v550 = vand.u32 %v22, 4294901760
    %v551 = vsub.f32 %v22, %v550
    %v552 = vand.u32 %v551, 4294901760
    %553 = vmatpush1.msra.mxu0 %v552
    %554 = vmatprep.subr.mxu0 0.0
    %555 = vmatpush2.msra.mxu0 0.0
    %556 = vmatprep.subr.mxu0 0.0
    %557 = vmatpush2.msra.mxu0 0.0
    %558 = vmatprep.subr.mxu0 0.0
    %559 = vmatpush2.msra.mxu0 0.0
    %560 = vmatprep.subr.mxu0 0.0
    %561 = vmatpush2.msra.mxu0 0.0
    %562 = vmatprep.subr.mxu0 0.0
    %563 = vmatpush2.msra.mxu0 0.0
    %564 = vmatprep.subr.mxu0 0.0
    %565 = vmatpush2.msra.mxu0 0.0
    %566 = vmatprep.subr.mxu0 0.0
    %567 = vmatpush2.msra.mxu0 0.0
    %568 = vmatprep.subr.mxu0 0.0
    %569 = vmatpush2.msra.mxu0 0.0
    %570 = vmatprep.subr.mxu0 0.0
    %571 = vmatpush2.msra.mxu0 0.0
    %572 = vmatprep.subr.mxu0 0.0
    %573 = vmatpush2.msra.mxu0 0.0
    %574 = vmatprep.subr.mxu0 0.0
    %575 = vmatpush2.msra.mxu0 0.0
    %576 = vmatprep.subr.mxu0 0.0
    %577 = vmatpush2.msra.mxu0 0.0
    %578 = vmatprep.subr.mxu0 0.0
    %579 = vmatpush2.msra.mxu0 0.0
    %580 = vmatprep.subr.mxu0 0.0
    %581 = vmatpush2.msra.mxu0 0.0
    %582 = vmatprep.subr.mxu0 0.0
    %583 = vmatpush2.msra.mxu0 0.0
    %584 = vmatprep.subr.mxu0 0.0
    %585 = vmatpush2.msra.mxu0 0.0
    %586 = vmatprep.mubr.f32.mxu0 0.0
    %v587 = vand.u32 %v21, 4294901760
    %588 = vmatmul.mubr.f32.gmra.mxu0 %v587
    %v589 = vpop.f32.mrf.mxu0
    %v590 = vadd.f32 %v471, %v589
    %v591 = vpop.f32.mrf.mxu0
    %592 = vdwg.mxu0
    %593 = vmatprep.subr.mxu0 0.0
    %v594 = vand.u32 %v37, 4294901760
    %595 = vmatpush1.msra.mxu0 %v594
    %596 = vmatprep.subr.mxu0 0.0
    %v597 = vand.u32 %v36, 4294901760
    %598 = vmatpush1.msra.mxu0 %v597
    %599 = vmatprep.subr.mxu0 0.0
    %v600 = vand.u32 %v35, 4294901760
    %601 = vmatpush1.msra.mxu0 %v600
    %602 = vmatprep.subr.mxu0 0.0
    %v603 = vand.u32 %v34, 4294901760
    %604 = vmatpush1.msra.mxu0 %v603
    %605 = vmatprep.subr.mxu0 0.0
    %v606 = vand.u32 %v33, 4294901760
    %607 = vmatpush1.msra.mxu0 %v606
    %608 = vmatprep.subr.mxu0 0.0
    %v609 = vand.u32 %v32, 4294901760
    %610 = vmatpush1.msra.mxu0 %v609
    %611 = vmatprep.subr.mxu0 0.0
    %v612 = vand.u32 %v31, 4294901760
    %613 = vmatpush1.msra.mxu0 %v612
    %614 = vmatprep.subr.mxu0 0.0
    %v615 = vand.u32 %v30, 4294901760
    %616 = vmatpush1.msra.mxu0 %v615
    %617 = vmatprep.subr.mxu0 0.0
    %v618 = vand.u32 %v29, 4294901760
    %619 = vmatpush1.msra.mxu0 %v618
    %620 = vmatprep.subr.mxu0 0.0
    %v621 = vand.u32 %v28, 4294901760
    %622 = vmatpush1.msra.mxu0 %v621
    %623 = vmatprep.subr.mxu0 0.0
    %v624 = vand.u32 %v27, 4294901760
    %625 = vmatpush1.msra.mxu0 %v624
    %626 = vmatprep.subr.mxu0 0.0
    %v627 = vand.u32 %v26, 4294901760
    %628 = vmatpush1.msra.mxu0 %v627
    %629 = vmatprep.subr.mxu0 0.0
    %v630 = vand.u32 %v25, 4294901760
    %631 = vmatpush1.msra.mxu0 %v630
    %632 = vmatprep.subr.mxu0 0.0
    %v633 = vand.u32 %v24, 4294901760
    %634 = vmatpush1.msra.mxu0 %v633
    %635 = vmatprep.subr.mxu0 0.0
    %v636 = vand.u32 %v23, 4294901760
    %637 = vmatpush1.msra.mxu0 %v636
    %638 = vmatprep.subr.mxu0 0.0
    %v639 = vand.u32 %v22, 4294901760
    %640 = vmatpush1.msra.mxu0 %v639
    %641 = vmatprep.subr.mxu0 0.0
    %642 = vmatpush2.msra.mxu0 0.0
    %643 = vmatprep.subr.mxu0 0.0
    %644 = vmatpush2.msra.mxu0 0.0
    %645 = vmatprep.subr.mxu0 0.0
    %646 = vmatpush2.msra.mxu0 0.0
    %647 = vmatprep.subr.mxu0 0.0
    %648 = vmatpush2.msra.mxu0 0.0
    %649 = vmatprep.subr.mxu0 0.0
    %650 = vmatpush2.msra.mxu0 0.0
    %651 = vmatprep.subr.mxu0 0.0
    %652 = vmatpush2.msra.mxu0 0.0
    %653 = vmatprep.subr.mxu0 0.0
    %654 = vmatpush2.msra.mxu0 0.0
    %655 = vmatprep.subr.mxu0 0.0
    %656 = vmatpush2.msra.mxu0 0.0
    %657 = vmatprep.subr.mxu0 0.0
    %658 = vmatpush2.msra.mxu0 0.0
    %659 = vmatprep.subr.mxu0 0.0
    %660 = vmatpush2.msra.mxu0 0.0
    %661 = vmatprep.subr.mxu0 0.0
    %662 = vmatpush2.msra.mxu0 0.0
    %663 = vmatprep.subr.mxu0 0.0
    %664 = vmatpush2.msra.mxu0 0.0
    %665 = vmatprep.subr.mxu0 0.0
    %666 = vmatpush2.msra.mxu0 0.0
    %667 = vmatprep.subr.mxu0 0.0
    %668 = vmatpush2.msra.mxu0 0.0
    %669 = vmatprep.subr.mxu0 0.0
    %670 = vmatpush2.msra.mxu0 0.0
    %671 = vmatprep.subr.mxu0 0.0
    %672 = vmatpush2.msra.mxu0 0.0
    %673 = vmatprep.mubr.f32.mxu0 0.0
    %v674 = vand.u32 %v21, 4294901760
    %675 = vmatmul.mubr.f32.gmra.mxu0 %v674
    %v676 = vpop.f32.mrf.mxu0
    %v677 = vadd.f32 %v590, %v676
    %v678 = vpop.f32.mrf.mxu0
    %679 = vdwg.mxu0
    %vm680 = vcmask 31744
    %v682 = vsel %vm680, %v677, 0
    %vm684 = vcmask 1043456
    %v686 = vsel %vm684, %v38, 0
    %688 = vmatprep.subr.mxu0 0.0
    %689 = vmatpush1.msra.mxu0 0.0
    %690 = vmatprep.subr.mxu0 0.0
    %691 = vmatpush1.msra.mxu0 0.0
    %692 = vmatprep.subr.mxu0 0.0
    %693 = vmatpush1.msra.mxu0 0.0
    %694 = vmatprep.subr.mxu0 0.0
    %695 = vmatpush1.msra.mxu0 0.0
    %696 = vmatprep.subr.mxu0 0.0
    %697 = vmatpush1.msra.mxu0 0.0
    %698 = vmatprep.subr.mxu0 0.0
    %699 = vmatpush1.msra.mxu0 0.0
    %700 = vmatprep.subr.mxu0 0.0
    %701 = vmatpush1.msra.mxu0 0.0
    %702 = vmatprep.subr.mxu0 0.0
    %703 = vmatpush1.msra.mxu0 0.0
    %704 = vmatprep.subr.mxu0 0.0
    %705 = vmatpush1.msra.mxu0 0.0
    %706 = vmatprep.subr.mxu0 0.0
    %707 = vmatpush1.msra.mxu0 0.0
    %708 = vmatprep.subr.mxu0 0.0
    %709 = vmatpush1.msra.mxu0 0.0
    %710 = vmatprep.subr.mxu0 0.0
    %711 = vmatpush1.msra.mxu0 0.0
    %712 = vmatprep.subr.mxu0 0.0
    %713 = vmatpush1.msra.mxu0 0.0
    %714 = vmatprep.subr.mxu0 0.0
    %715 = vmatpush1.msra.mxu0 0.0
    %716 = vmatprep.subr.mxu0 0.0
    %717 = vmatpush1.msra.mxu0 0.0
    %718 = vmatprep.subr.mxu0 0.0
    %v719 = vand.u32 %v686, 4294901760
    %720 = vmatpush1.msra.mxu0 %v719
    %721 = vmatprep.subr.mxu0 0.0
    %722 = vmatpush2.msra.mxu0 0.0
    %723 = vmatprep.subr.mxu0 0.0
    %724 = vmatpush2.msra.mxu0 0.0
    %725 = vmatprep.subr.mxu0 0.0
    %726 = vmatpush2.msra.mxu0 0.0
    %727 = vmatprep.subr.mxu0 0.0
    %728 = vmatpush2.msra.mxu0 0.0
    %729 = vmatprep.subr.mxu0 0.0
    %730 = vmatpush2.msra.mxu0 0.0
    %731 = vmatprep.subr.mxu0 0.0
    %732 = vmatpush2.msra.mxu0 0.0
    %733 = vmatprep.subr.mxu0 0.0
    %734 = vmatpush2.msra.mxu0 0.0
    %735 = vmatprep.subr.mxu0 0.0
    %736 = vmatpush2.msra.mxu0 0.0
    %737 = vmatprep.subr.mxu0 0.0
    %738 = vmatpush2.msra.mxu0 0.0
    %739 = vmatprep.subr.mxu0 0.0
    %740 = vmatpush2.msra.mxu0 0.0
    %741 = vmatprep.subr.mxu0 0.0
    %742 = vmatpush2.msra.mxu0 0.0
    %743 = vmatprep.subr.mxu0 0.0
    %744 = vmatpush2.msra.mxu0 0.0
    %745 = vmatprep.subr.mxu0 0.0
    %746 = vmatpush2.msra.mxu0 0.0
    %747 = vmatprep.subr.mxu0 0.0
    %748 = vmatpush2.msra.mxu0 0.0
    %749 = vmatprep.subr.mxu0 0.0
    %750 = vmatpush2.msra.mxu0 0.0
    %751 = vmatprep.subr.mxu0 0.0
    %752 = vmatpush2.msra.mxu0 0.0
    %753 = vmatprep.mubr.f32.mxu0 0.0
    %v754 = vand.u32 %v682, 4294901760
    %v755 = vsub.f32 %v682, %v754
    %v756 = vand.u32 %v755, 4294901760
    %v757 = vsub.f32 %v755, %v756
    %v758 = vand.u32 %v757, 4294901760
    %759 = vmatmul.mubr.f32.gmra.mxu0 %v758
    %v760 = vpop.f32.mrf.mxu0
    %v761 = vadd.f32 0.0, %v760
    %v762 = vpop.f32.mrf.mxu0
    %763 = vdwg.mxu0
    %764 = vmatprep.subr.mxu0 0.0
    %765 = vmatpush1.msra.mxu0 0.0
    %766 = vmatprep.subr.mxu0 0.0
    %767 = vmatpush1.msra.mxu0 0.0
    %768 = vmatprep.subr.mxu0 0.0
    %769 = vmatpush1.msra.mxu0 0.0
    %770 = vmatprep.subr.mxu0 0.0
    %771 = vmatpush1.msra.mxu0 0.0
    %772 = vmatprep.subr.mxu0 0.0
    %773 = vmatpush1.msra.mxu0 0.0
    %774 = vmatprep.subr.mxu0 0.0
    %775 = vmatpush1.msra.mxu0 0.0
    %776 = vmatprep.subr.mxu0 0.0
    %777 = vmatpush1.msra.mxu0 0.0
    %778 = vmatprep.subr.mxu0 0.0
    %779 = vmatpush1.msra.mxu0 0.0
    %780 = vmatprep.subr.mxu0 0.0
    %781 = vmatpush1.msra.mxu0 0.0
    %782 = vmatprep.subr.mxu0 0.0
    %783 = vmatpush1.msra.mxu0 0.0
    %784 = vmatprep.subr.mxu0 0.0
    %785 = vmatpush1.msra.mxu0 0.0
    %786 = vmatprep.subr.mxu0 0.0
    %787 = vmatpush1.msra.mxu0 0.0
    %788 = vmatprep.subr.mxu0 0.0
    %789 = vmatpush1.msra.mxu0 0.0
    %790 = vmatprep.subr.mxu0 0.0
    %791 = vmatpush1.msra.mxu0 0.0
    %792 = vmatprep.subr.mxu0 0.0
    %793 = vmatpush1.msra.mxu0 0.0
    %794 = vmatprep.subr.mxu0 0.0
    %v795 = vand.u32 %v686, 4294901760
    %v796 = vsub.f32 %v686, %v795
    %v797 = vand.u32 %v796, 4294901760
    %v798 = vsub.f32 %v796, %v797
    %v799 = vand.u32 %v798, 4294901760
    %800 = vmatpush1.msra.mxu0 %v799
    %801 = vmatprep.subr.mxu0 0.0
    %802 = vmatpush2.msra.mxu0 0.0
    %803 = vmatprep.subr.mxu0 0.0
    %804 = vmatpush2.msra.mxu0 0.0
    %805 = vmatprep.subr.mxu0 0.0
    %806 = vmatpush2.msra.mxu0 0.0
    %807 = vmatprep.subr.mxu0 0.0
    %808 = vmatpush2.msra.mxu0 0.0
    %809 = vmatprep.subr.mxu0 0.0
    %810 = vmatpush2.msra.mxu0 0.0
    %811 = vmatprep.subr.mxu0 0.0
    %812 = vmatpush2.msra.mxu0 0.0
    %813 = vmatprep.subr.mxu0 0.0
    %814 = vmatpush2.msra.mxu0 0.0
    %815 = vmatprep.subr.mxu0 0.0
    %816 = vmatpush2.msra.mxu0 0.0
    %817 = vmatprep.subr.mxu0 0.0
    %818 = vmatpush2.msra.mxu0 0.0
    %819 = vmatprep.subr.mxu0 0.0
    %820 = vmatpush2.msra.mxu0 0.0
    %821 = vmatprep.subr.mxu0 0.0
    %822 = vmatpush2.msra.mxu0 0.0
    %823 = vmatprep.subr.mxu0 0.0
    %824 = vmatpush2.msra.mxu0 0.0
    %825 = vmatprep.subr.mxu0 0.0
    %826 = vmatpush2.msra.mxu0 0.0
    %827 = vmatprep.subr.mxu0 0.0
    %828 = vmatpush2.msra.mxu0 0.0
    %829 = vmatprep.subr.mxu0 0.0
    %830 = vmatpush2.msra.mxu0 0.0
    %831 = vmatprep.subr.mxu0 0.0
    %832 = vmatpush2.msra.mxu0 0.0
    %833 = vmatprep.mubr.f32.mxu0 0.0
    %v834 = vand.u32 %v682, 4294901760
    %835 = vmatmul.mubr.f32.gmra.mxu0 %v834
    %v836 = vpop.f32.mrf.mxu0
    %v837 = vadd.f32 %v761, %v836
    %v838 = vpop.f32.mrf.mxu0
    %839 = vdwg.mxu0
    %840 = vmatprep.subr.mxu0 0.0
    %841 = vmatpush1.msra.mxu0 0.0
    %842 = vmatprep.subr.mxu0 0.0
    %843 = vmatpush1.msra.mxu0 0.0
    %844 = vmatprep.subr.mxu0 0.0
    %845 = vmatpush1.msra.mxu0 0.0
    %846 = vmatprep.subr.mxu0 0.0
    %847 = vmatpush1.msra.mxu0 0.0
    %848 = vmatprep.subr.mxu0 0.0
    %849 = vmatpush1.msra.mxu0 0.0
    %850 = vmatprep.subr.mxu0 0.0
    %851 = vmatpush1.msra.mxu0 0.0
    %852 = vmatprep.subr.mxu0 0.0
    %853 = vmatpush1.msra.mxu0 0.0
    %854 = vmatprep.subr.mxu0 0.0
    %855 = vmatpush1.msra.mxu0 0.0
    %856 = vmatprep.subr.mxu0 0.0
    %857 = vmatpush1.msra.mxu0 0.0
    %858 = vmatprep.subr.mxu0 0.0
    %859 = vmatpush1.msra.mxu0 0.0
    %860 = vmatprep.subr.mxu0 0.0
    %861 = vmatpush1.msra.mxu0 0.0
    %862 = vmatprep.subr.mxu0 0.0
    %863 = vmatpush1.msra.mxu0 0.0
    %864 = vmatprep.subr.mxu0 0.0
    %865 = vmatpush1.msra.mxu0 0.0
    %866 = vmatprep.subr.mxu0 0.0
    %867 = vmatpush1.msra.mxu0 0.0
    %868 = vmatprep.subr.mxu0 0.0
    %869 = vmatpush1.msra.mxu0 0.0
    %870 = vmatprep.subr.mxu0 0.0
    %v871 = vand.u32 %v686, 4294901760
    %v872 = vsub.f32 %v686, %v871
    %873 = vmatpush1.msra.mxu0 %v872
    %874 = vmatprep.subr.mxu0 0.0
    %875 = vmatpush2.msra.mxu0 0.0
    %876 = vmatprep.subr.mxu0 0.0
    %877 = vmatpush2.msra.mxu0 0.0
    %878 = vmatprep.subr.mxu0 0.0
    %879 = vmatpush2.msra.mxu0 0.0
    %880 = vmatprep.subr.mxu0 0.0
    %881 = vmatpush2.msra.mxu0 0.0
    %882 = vmatprep.subr.mxu0 0.0
    %883 = vmatpush2.msra.mxu0 0.0
    %884 = vmatprep.subr.mxu0 0.0
    %885 = vmatpush2.msra.mxu0 0.0
    %886 = vmatprep.subr.mxu0 0.0
    %887 = vmatpush2.msra.mxu0 0.0
    %888 = vmatprep.subr.mxu0 0.0
    %889 = vmatpush2.msra.mxu0 0.0
    %890 = vmatprep.subr.mxu0 0.0
    %891 = vmatpush2.msra.mxu0 0.0
    %892 = vmatprep.subr.mxu0 0.0
    %893 = vmatpush2.msra.mxu0 0.0
    %894 = vmatprep.subr.mxu0 0.0
    %895 = vmatpush2.msra.mxu0 0.0
    %896 = vmatprep.subr.mxu0 0.0
    %897 = vmatpush2.msra.mxu0 0.0
    %898 = vmatprep.subr.mxu0 0.0
    %899 = vmatpush2.msra.mxu0 0.0
    %900 = vmatprep.subr.mxu0 0.0
    %901 = vmatpush2.msra.mxu0 0.0
    %902 = vmatprep.subr.mxu0 0.0
    %903 = vmatpush2.msra.mxu0 0.0
    %904 = vmatprep.subr.mxu0 0.0
    %905 = vmatpush2.msra.mxu0 0.0
    %906 = vmatprep.mubr.f32.mxu0 0.0
    %v907 = vand.u32 %v682, 4294901760
    %v908 = vsub.f32 %v682, %v907
    %909 = vmatmul.mubr.f32.gmra.mxu0 %v908
    %v910 = vpop.f32.mrf.mxu0
    %v911 = vadd.f32 %v837, %v910
    %v912 = vpop.f32.mrf.mxu0
    %913 = vdwg.mxu0
    %914 = vmatprep.subr.mxu0 0.0
    %915 = vmatpush1.msra.mxu0 0.0
    %916 = vmatprep.subr.mxu0 0.0
    %917 = vmatpush1.msra.mxu0 0.0
    %918 = vmatprep.subr.mxu0 0.0
    %919 = vmatpush1.msra.mxu0 0.0
    %920 = vmatprep.subr.mxu0 0.0
    %921 = vmatpush1.msra.mxu0 0.0
    %922 = vmatprep.subr.mxu0 0.0
    %923 = vmatpush1.msra.mxu0 0.0
    %924 = vmatprep.subr.mxu0 0.0
    %925 = vmatpush1.msra.mxu0 0.0
    %926 = vmatprep.subr.mxu0 0.0
    %927 = vmatpush1.msra.mxu0 0.0
    %928 = vmatprep.subr.mxu0 0.0
    %929 = vmatpush1.msra.mxu0 0.0
    %930 = vmatprep.subr.mxu0 0.0
    %931 = vmatpush1.msra.mxu0 0.0
    %932 = vmatprep.subr.mxu0 0.0
    %933 = vmatpush1.msra.mxu0 0.0
    %934 = vmatprep.subr.mxu0 0.0
    %935 = vmatpush1.msra.mxu0 0.0
    %936 = vmatprep.subr.mxu0 0.0
    %937 = vmatpush1.msra.mxu0 0.0
    %938 = vmatprep.subr.mxu0 0.0
    %939 = vmatpush1.msra.mxu0 0.0
    %940 = vmatprep.subr.mxu0 0.0
    %941 = vmatpush1.msra.mxu0 0.0
    %942 = vmatprep.subr.mxu0 0.0
    %943 = vmatpush1.msra.mxu0 0.0
    %944 = vmatprep.subr.mxu0 0.0
    %v945 = vand.u32 %v686, 4294901760
    %946 = vmatpush1.msra.mxu0 %v945
    %947 = vmatprep.subr.mxu0 0.0
    %948 = vmatpush2.msra.mxu0 0.0
    %949 = vmatprep.subr.mxu0 0.0
    %950 = vmatpush2.msra.mxu0 0.0
    %951 = vmatprep.subr.mxu0 0.0
    %952 = vmatpush2.msra.mxu0 0.0
    %953 = vmatprep.subr.mxu0 0.0
    %954 = vmatpush2.msra.mxu0 0.0
    %955 = vmatprep.subr.mxu0 0.0
    %956 = vmatpush2.msra.mxu0 0.0
    %957 = vmatprep.subr.mxu0 0.0
    %958 = vmatpush2.msra.mxu0 0.0
    %959 = vmatprep.subr.mxu0 0.0
    %960 = vmatpush2.msra.mxu0 0.0
    %961 = vmatprep.subr.mxu0 0.0
    %962 = vmatpush2.msra.mxu0 0.0
    %963 = vmatprep.subr.mxu0 0.0
    %964 = vmatpush2.msra.mxu0 0.0
    %965 = vmatprep.subr.mxu0 0.0
    %966 = vmatpush2.msra.mxu0 0.0
    %967 = vmatprep.subr.mxu0 0.0
    %968 = vmatpush2.msra.mxu0 0.0
    %969 = vmatprep.subr.mxu0 0.0
    %970 = vmatpush2.msra.mxu0 0.0
    %971 = vmatprep.subr.mxu0 0.0
    %972 = vmatpush2.msra.mxu0 0.0
    %973 = vmatprep.subr.mxu0 0.0
    %974 = vmatpush2.msra.mxu0 0.0
    %975 = vmatprep.subr.mxu0 0.0
    %976 = vmatpush2.msra.mxu0 0.0
    %977 = vmatprep.subr.mxu0 0.0
    %978 = vmatpush2.msra.mxu0 0.0
    %979 = vmatprep.mubr.f32.mxu0 0.0
    %v980 = vand.u32 %v682, 4294901760
    %v981 = vsub.f32 %v682, %v980
    %v982 = vand.u32 %v981, 4294901760
    %983 = vmatmul.mubr.f32.gmra.mxu0 %v982
    %v984 = vpop.f32.mrf.mxu0
    %v985 = vadd.f32 %v911, %v984
    %v986 = vpop.f32.mrf.mxu0
    %987 = vdwg.mxu0
    %988 = vmatprep.subr.mxu0 0.0
    %989 = vmatpush1.msra.mxu0 0.0
    %990 = vmatprep.subr.mxu0 0.0
    %991 = vmatpush1.msra.mxu0 0.0
    %992 = vmatprep.subr.mxu0 0.0
    %993 = vmatpush1.msra.mxu0 0.0
    %994 = vmatprep.subr.mxu0 0.0
    %995 = vmatpush1.msra.mxu0 0.0
    %996 = vmatprep.subr.mxu0 0.0
    %997 = vmatpush1.msra.mxu0 0.0
    %998 = vmatprep.subr.mxu0 0.0
    %999 = vmatpush1.msra.mxu0 0.0
    %1000 = vmatprep.subr.mxu0 0.0
    %1001 = vmatpush1.msra.mxu0 0.0
    %1002 = vmatprep.subr.mxu0 0.0
    %1003 = vmatpush1.msra.mxu0 0.0
    %1004 = vmatprep.subr.mxu0 0.0
    %1005 = vmatpush1.msra.mxu0 0.0
    %1006 = vmatprep.subr.mxu0 0.0
    %1007 = vmatpush1.msra.mxu0 0.0
    %1008 = vmatprep.subr.mxu0 0.0
    %1009 = vmatpush1.msra.mxu0 0.0
    %1010 = vmatprep.subr.mxu0 0.0
    %1011 = vmatpush1.msra.mxu0 0.0
    %1012 = vmatprep.subr.mxu0 0.0
    %1013 = vmatpush1.msra.mxu0 0.0
    %1014 = vmatprep.subr.mxu0 0.0
    %1015 = vmatpush1.msra.mxu0 0.0
    %1016 = vmatprep.subr.mxu0 0.0
    %1017 = vmatpush1.msra.mxu0 0.0
    %1018 = vmatprep.subr.mxu0 0.0
    %v1019 = vand.u32 %v686, 4294901760
    %v1020 = vsub.f32 %v686, %v1019
    %v1021 = vand.u32 %v1020, 4294901760
    %1022 = vmatpush1.msra.mxu0 %v1021
    %1023 = vmatprep.subr.mxu0 0.0
    %1024 = vmatpush2.msra.mxu0 0.0
    %1025 = vmatprep.subr.mxu0 0.0
    %1026 = vmatpush2.msra.mxu0 0.0
    %1027 = vmatprep.subr.mxu0 0.0
    %1028 = vmatpush2.msra.mxu0 0.0
    %1029 = vmatprep.subr.mxu0 0.0
    %1030 = vmatpush2.msra.mxu0 0.0
    %1031 = vmatprep.subr.mxu0 0.0
    %1032 = vmatpush2.msra.mxu0 0.0
    %1033 = vmatprep.subr.mxu0 0.0
    %1034 = vmatpush2.msra.mxu0 0.0
    %1035 = vmatprep.subr.mxu0 0.0
    %1036 = vmatpush2.msra.mxu0 0.0
    %1037 = vmatprep.subr.mxu0 0.0
    %1038 = vmatpush2.msra.mxu0 0.0
    %1039 = vmatprep.subr.mxu0 0.0
    %1040 = vmatpush2.msra.mxu0 0.0
    %1041 = vmatprep.subr.mxu0 0.0
    %1042 = vmatpush2.msra.mxu0 0.0
    %1043 = vmatprep.subr.mxu0 0.0
    %1044 = vmatpush2.msra.mxu0 0.0
    %1045 = vmatprep.subr.mxu0 0.0
    %1046 = vmatpush2.msra.mxu0 0.0
    %1047 = vmatprep.subr.mxu0 0.0
    %1048 = vmatpush2.msra.mxu0 0.0
    %1049 = vmatprep.subr.mxu0 0.0
    %1050 = vmatpush2.msra.mxu0 0.0
    %1051 = vmatprep.subr.mxu0 0.0
    %1052 = vmatpush2.msra.mxu0 0.0
    %1053 = vmatprep.subr.mxu0 0.0
    %1054 = vmatpush2.msra.mxu0 0.0
    %1055 = vmatprep.mubr.f32.mxu0 0.0
    %v1056 = vand.u32 %v682, 4294901760
    %1057 = vmatmul.mubr.f32.gmra.mxu0 %v1056
    %v1058 = vpop.f32.mrf.mxu0
    %v1059 = vadd.f32 %v985, %v1058
    %v1060 = vpop.f32.mrf.mxu0
    %1061 = vdwg.mxu0
    %1062 = vmatprep.subr.mxu0 0.0
    %1063 = vmatpush1.msra.mxu0 0.0
    %1064 = vmatprep.subr.mxu0 0.0
    %1065 = vmatpush1.msra.mxu0 0.0
    %1066 = vmatprep.subr.mxu0 0.0
    %1067 = vmatpush1.msra.mxu0 0.0
    %1068 = vmatprep.subr.mxu0 0.0
    %1069 = vmatpush1.msra.mxu0 0.0
    %1070 = vmatprep.subr.mxu0 0.0
    %1071 = vmatpush1.msra.mxu0 0.0
    %1072 = vmatprep.subr.mxu0 0.0
    %1073 = vmatpush1.msra.mxu0 0.0
    %1074 = vmatprep.subr.mxu0 0.0
    %1075 = vmatpush1.msra.mxu0 0.0
    %1076 = vmatprep.subr.mxu0 0.0
    %1077 = vmatpush1.msra.mxu0 0.0
    %1078 = vmatprep.subr.mxu0 0.0
    %1079 = vmatpush1.msra.mxu0 0.0
    %1080 = vmatprep.subr.mxu0 0.0
    %1081 = vmatpush1.msra.mxu0 0.0
    %1082 = vmatprep.subr.mxu0 0.0
    %1083 = vmatpush1.msra.mxu0 0.0
    %1084 = vmatprep.subr.mxu0 0.0
    %1085 = vmatpush1.msra.mxu0 0.0
    %1086 = vmatprep.subr.mxu0 0.0
    %1087 = vmatpush1.msra.mxu0 0.0
    %1088 = vmatprep.subr.mxu0 0.0
    %1089 = vmatpush1.msra.mxu0 0.0
    %1090 = vmatprep.subr.mxu0 0.0
    %1091 = vmatpush1.msra.mxu0 0.0
    %1092 = vmatprep.subr.mxu0 0.0
    %v1093 = vand.u32 %v686, 4294901760
    %1094 = vmatpush1.msra.mxu0 %v1093
    %1095 = vmatprep.subr.mxu0 0.0
    %1096 = vmatpush2.msra.mxu0 0.0
    %1097 = vmatprep.subr.mxu0 0.0
    %1098 = vmatpush2.msra.mxu0 0.0
    %1099 = vmatprep.subr.mxu0 0.0
    %1100 = vmatpush2.msra.mxu0 0.0
    %1101 = vmatprep.subr.mxu0 0.0
    %1102 = vmatpush2.msra.mxu0 0.0
    %1103 = vmatprep.subr.mxu0 0.0
    %1104 = vmatpush2.msra.mxu0 0.0
    %1105 = vmatprep.subr.mxu0 0.0
    %1106 = vmatpush2.msra.mxu0 0.0
    %1107 = vmatprep.subr.mxu0 0.0
    %1108 = vmatpush2.msra.mxu0 0.0
    %1109 = vmatprep.subr.mxu0 0.0
    %1110 = vmatpush2.msra.mxu0 0.0
    %1111 = vmatprep.subr.mxu0 0.0
    %1112 = vmatpush2.msra.mxu0 0.0
    %1113 = vmatprep.subr.mxu0 0.0
    %1114 = vmatpush2.msra.mxu0 0.0
    %1115 = vmatprep.subr.mxu0 0.0
    %1116 = vmatpush2.msra.mxu0 0.0
    %1117 = vmatprep.subr.mxu0 0.0
    %1118 = vmatpush2.msra.mxu0 0.0
    %1119 = vmatprep.subr.mxu0 0.0
    %1120 = vmatpush2.msra.mxu0 0.0
    %1121 = vmatprep.subr.mxu0 0.0
    %1122 = vmatpush2.msra.mxu0 0.0
    %1123 = vmatprep.subr.mxu0 0.0
    %1124 = vmatpush2.msra.mxu0 0.0
    %1125 = vmatprep.subr.mxu0 0.0
    %1126 = vmatpush2.msra.mxu0 0.0
    %1127 = vmatprep.mubr.f32.mxu0 0.0
    %v1128 = vand.u32 %v682, 4294901760
    %1129 = vmatmul.mubr.f32.gmra.mxu0 %v1128
    %v1130 = vpop.f32.mrf.mxu0
    %v1131 = vadd.f32 %v1059, %v1130
    %v1132 = vpop.f32.mrf.mxu0
    %1133 = vdwg.mxu0
    %v1134 = vmul.f32 %v1131, 0.03125
    %v1135 = vsub.f32 %v21, %v1134
    %v1136 = vmul.f32 %v1135, %v1135
    %1137 = vmatprep.subr.mxu0 0.0
    %v1138 = vand.u32 %v37, 4294901760
    %1139 = vmatpush1.msra.mxu0 %v1138
    %1140 = vmatprep.subr.mxu0 0.0
    %v1141 = vand.u32 %v36, 4294901760
    %1142 = vmatpush1.msra.mxu0 %v1141
    %1143 = vmatprep.subr.mxu0 0.0
    %v1144 = vand.u32 %v35, 4294901760
    %1145 = vmatpush1.msra.mxu0 %v1144
    %1146 = vmatprep.subr.mxu0 0.0
    %v1147 = vand.u32 %v34, 4294901760
    %1148 = vmatpush1.msra.mxu0 %v1147
    %1149 = vmatprep.subr.mxu0 0.0
    %v1150 = vand.u32 %v33, 4294901760
    %1151 = vmatpush1.msra.mxu0 %v1150
    %1152 = vmatprep.subr.mxu0 0.0
    %v1153 = vand.u32 %v32, 4294901760
    %1154 = vmatpush1.msra.mxu0 %v1153
    %1155 = vmatprep.subr.mxu0 0.0
    %v1156 = vand.u32 %v31, 4294901760
    %1157 = vmatpush1.msra.mxu0 %v1156
    %1158 = vmatprep.subr.mxu0 0.0
    %v1159 = vand.u32 %v30, 4294901760
    %1160 = vmatpush1.msra.mxu0 %v1159
    %1161 = vmatprep.subr.mxu0 0.0
    %v1162 = vand.u32 %v29, 4294901760
    %1163 = vmatpush1.msra.mxu0 %v1162
    %1164 = vmatprep.subr.mxu0 0.0
    %v1165 = vand.u32 %v28, 4294901760
    %1166 = vmatpush1.msra.mxu0 %v1165
    %1167 = vmatprep.subr.mxu0 0.0
    %v1168 = vand.u32 %v27, 4294901760
    %1169 = vmatpush1.msra.mxu0 %v1168
    %1170 = vmatprep.subr.mxu0 0.0
    %v1171 = vand.u32 %v26, 4294901760
    %1172 = vmatpush1.msra.mxu0 %v1171
    %1173 = vmatprep.subr.mxu0 0.0
    %v1174 = vand.u32 %v25, 4294901760
    %1175 = vmatpush1.msra.mxu0 %v1174
    %1176 = vmatprep.subr.mxu0 0.0
    %v1177 = vand.u32 %v24, 4294901760
    %1178 = vmatpush1.msra.mxu0 %v1177
    %1179 = vmatprep.subr.mxu0 0.0
    %v1180 = vand.u32 %v23, 4294901760
    %1181 = vmatpush1.msra.mxu0 %v1180
    %1182 = vmatprep.subr.mxu0 0.0
    %v1183 = vand.u32 %v22, 4294901760
    %1184 = vmatpush1.msra.mxu0 %v1183
    %1185 = vmatprep.subr.mxu0 0.0
    %1186 = vmatpush2.msra.mxu0 0.0
    %1187 = vmatprep.subr.mxu0 0.0
    %1188 = vmatpush2.msra.mxu0 0.0
    %1189 = vmatprep.subr.mxu0 0.0
    %1190 = vmatpush2.msra.mxu0 0.0
    %1191 = vmatprep.subr.mxu0 0.0
    %1192 = vmatpush2.msra.mxu0 0.0
    %1193 = vmatprep.subr.mxu0 0.0
    %1194 = vmatpush2.msra.mxu0 0.0
    %1195 = vmatprep.subr.mxu0 0.0
    %1196 = vmatpush2.msra.mxu0 0.0
    %1197 = vmatprep.subr.mxu0 0.0
    %1198 = vmatpush2.msra.mxu0 0.0
    %1199 = vmatprep.subr.mxu0 0.0
    %1200 = vmatpush2.msra.mxu0 0.0
    %1201 = vmatprep.subr.mxu0 0.0
    %1202 = vmatpush2.msra.mxu0 0.0
    %1203 = vmatprep.subr.mxu0 0.0
    %1204 = vmatpush2.msra.mxu0 0.0
    %1205 = vmatprep.subr.mxu0 0.0
    %1206 = vmatpush2.msra.mxu0 0.0
    %1207 = vmatprep.subr.mxu0 0.0
    %1208 = vmatpush2.msra.mxu0 0.0
    %1209 = vmatprep.subr.mxu0 0.0
    %1210 = vmatpush2.msra.mxu0 0.0
    %1211 = vmatprep.subr.mxu0 0.0
    %1212 = vmatpush2.msra.mxu0 0.0
    %1213 = vmatprep.subr.mxu0 0.0
    %1214 = vmatpush2.msra.mxu0 0.0
    %1215 = vmatprep.subr.mxu0 0.0
    %1216 = vmatpush2.msra.mxu0 0.0
    %1217 = vmatprep.mubr.f32.mxu0 0.0
    %v1218 = vand.u32 %v1136, 4294901760
    %v1219 = vsub.f32 %v1136, %v1218
    %v1220 = vand.u32 %v1219, 4294901760
    %v1221 = vsub.f32 %v1219, %v1220
    %v1222 = vand.u32 %v1221, 4294901760
    %1223 = vmatmul.mubr.f32.gmra.mxu0 %v1222
    %v1224 = vpop.f32.mrf.mxu0
    %v1225 = vadd.f32 0.0, %v1224
    %v1226 = vpop.f32.mrf.mxu0
    %1227 = vdwg.mxu0
    %1228 = vmatprep.subr.mxu0 0.0
    %v1229 = vand.u32 %v37, 4294901760
    %v1230 = vsub.f32 %v37, %v1229
    %v1231 = vand.u32 %v1230, 4294901760
    %v1232 = vsub.f32 %v1230, %v1231
    %v1233 = vand.u32 %v1232, 4294901760
    %1234 = vmatpush1.msra.mxu0 %v1233
    %1235 = vmatprep.subr.mxu0 0.0
    %v1236 = vand.u32 %v36, 4294901760
    %v1237 = vsub.f32 %v36, %v1236
    %v1238 = vand.u32 %v1237, 4294901760
    %v1239 = vsub.f32 %v1237, %v1238
    %v1240 = vand.u32 %v1239, 4294901760
    %1241 = vmatpush1.msra.mxu0 %v1240
    %1242 = vmatprep.subr.mxu0 0.0
    %v1243 = vand.u32 %v35, 4294901760
    %v1244 = vsub.f32 %v35, %v1243
    %v1245 = vand.u32 %v1244, 4294901760
    %v1246 = vsub.f32 %v1244, %v1245
    %v1247 = vand.u32 %v1246, 4294901760
    %1248 = vmatpush1.msra.mxu0 %v1247
    %1249 = vmatprep.subr.mxu0 0.0
    %v1250 = vand.u32 %v34, 4294901760
    %v1251 = vsub.f32 %v34, %v1250
    %v1252 = vand.u32 %v1251, 4294901760
    %v1253 = vsub.f32 %v1251, %v1252
    %v1254 = vand.u32 %v1253, 4294901760
    %1255 = vmatpush1.msra.mxu0 %v1254
    %1256 = vmatprep.subr.mxu0 0.0
    %v1257 = vand.u32 %v33, 4294901760
    %v1258 = vsub.f32 %v33, %v1257
    %v1259 = vand.u32 %v1258, 4294901760
    %v1260 = vsub.f32 %v1258, %v1259
    %v1261 = vand.u32 %v1260, 4294901760
    %1262 = vmatpush1.msra.mxu0 %v1261
    %1263 = vmatprep.subr.mxu0 0.0
    %v1264 = vand.u32 %v32, 4294901760
    %v1265 = vsub.f32 %v32, %v1264
    %v1266 = vand.u32 %v1265, 4294901760
    %v1267 = vsub.f32 %v1265, %v1266
    %v1268 = vand.u32 %v1267, 4294901760
    %1269 = vmatpush1.msra.mxu0 %v1268
    %1270 = vmatprep.subr.mxu0 0.0
    %v1271 = vand.u32 %v31, 4294901760
    %v1272 = vsub.f32 %v31, %v1271
    %v1273 = vand.u32 %v1272, 4294901760
    %v1274 = vsub.f32 %v1272, %v1273
    %v1275 = vand.u32 %v1274, 4294901760
    %1276 = vmatpush1.msra.mxu0 %v1275
    %1277 = vmatprep.subr.mxu0 0.0
    %v1278 = vand.u32 %v30, 4294901760
    %v1279 = vsub.f32 %v30, %v1278
    %v1280 = vand.u32 %v1279, 4294901760
    %v1281 = vsub.f32 %v1279, %v1280
    %v1282 = vand.u32 %v1281, 4294901760
    %1283 = vmatpush1.msra.mxu0 %v1282
    %1284 = vmatprep.subr.mxu0 0.0
    %v1285 = vand.u32 %v29, 4294901760
    %v1286 = vsub.f32 %v29, %v1285
    %v1287 = vand.u32 %v1286, 4294901760
    %v1288 = vsub.f32 %v1286, %v1287
    %v1289 = vand.u32 %v1288, 4294901760
    %1290 = vmatpush1.msra.mxu0 %v1289
    %1291 = vmatprep.subr.mxu0 0.0
    %v1292 = vand.u32 %v28, 4294901760
    %v1293 = vsub.f32 %v28, %v1292
    %v1294 = vand.u32 %v1293, 4294901760
    %v1295 = vsub.f32 %v1293, %v1294
    %v1296 = vand.u32 %v1295, 4294901760
    %1297 = vmatpush1.msra.mxu0 %v1296
    %1298 = vmatprep.subr.mxu0 0.0
    %v1299 = vand.u32 %v27, 4294901760
    %v1300 = vsub.f32 %v27, %v1299
    %v1301 = vand.u32 %v1300, 4294901760
    %v1302 = vsub.f32 %v1300, %v1301
    %v1303 = vand.u32 %v1302, 4294901760
    %1304 = vmatpush1.msra.mxu0 %v1303
    %1305 = vmatprep.subr.mxu0 0.0
    %v1306 = vand.u32 %v26, 4294901760
    %v1307 = vsub.f32 %v26, %v1306
    %v1308 = vand.u32 %v1307, 4294901760
    %v1309 = vsub.f32 %v1307, %v1308
    %v1310 = vand.u32 %v1309, 4294901760
    %1311 = vmatpush1.msra.mxu0 %v1310
    %1312 = vmatprep.subr.mxu0 0.0
    %v1313 = vand.u32 %v25, 4294901760
    %v1314 = vsub.f32 %v25, %v1313
    %v1315 = vand.u32 %v1314, 4294901760
    %v1316 = vsub.f32 %v1314, %v1315
    %v1317 = vand.u32 %v1316, 4294901760
    %1318 = vmatpush1.msra.mxu0 %v1317
    %1319 = vmatprep.subr.mxu0 0.0
    %v1320 = vand.u32 %v24, 4294901760
    %v1321 = vsub.f32 %v24, %v1320
    %v1322 = vand.u32 %v1321, 4294901760
    %v1323 = vsub.f32 %v1321, %v1322
    %v1324 = vand.u32 %v1323, 4294901760
    %1325 = vmatpush1.msra.mxu0 %v1324
    %1326 = vmatprep.subr.mxu0 0.0
    %v1327 = vand.u32 %v23, 4294901760
    %v1328 = vsub.f32 %v23, %v1327
    %v1329 = vand.u32 %v1328, 4294901760
    %v1330 = vsub.f32 %v1328, %v1329
    %v1331 = vand.u32 %v1330, 4294901760
    %1332 = vmatpush1.msra.mxu0 %v1331
    %1333 = vmatprep.subr.mxu0 0.0
    %v1334 = vand.u32 %v22, 4294901760
    %v1335 = vsub.f32 %v22, %v1334
    %v1336 = vand.u32 %v1335, 4294901760
    %v1337 = vsub.f32 %v1335, %v1336
    %v1338 = vand.u32 %v1337, 4294901760
    %1339 = vmatpush1.msra.mxu0 %v1338
    %1340 = vmatprep.subr.mxu0 0.0
    %1341 = vmatpush2.msra.mxu0 0.0
    %1342 = vmatprep.subr.mxu0 0.0
    %1343 = vmatpush2.msra.mxu0 0.0
    %1344 = vmatprep.subr.mxu0 0.0
    %1345 = vmatpush2.msra.mxu0 0.0
    %1346 = vmatprep.subr.mxu0 0.0
    %1347 = vmatpush2.msra.mxu0 0.0
    %1348 = vmatprep.subr.mxu0 0.0
    %1349 = vmatpush2.msra.mxu0 0.0
    %1350 = vmatprep.subr.mxu0 0.0
    %1351 = vmatpush2.msra.mxu0 0.0
    %1352 = vmatprep.subr.mxu0 0.0
    %1353 = vmatpush2.msra.mxu0 0.0
    %1354 = vmatprep.subr.mxu0 0.0
    %1355 = vmatpush2.msra.mxu0 0.0
    %1356 = vmatprep.subr.mxu0 0.0
    %1357 = vmatpush2.msra.mxu0 0.0
    %1358 = vmatprep.subr.mxu0 0.0
    %1359 = vmatpush2.msra.mxu0 0.0
    %1360 = vmatprep.subr.mxu0 0.0
    %1361 = vmatpush2.msra.mxu0 0.0
    %1362 = vmatprep.subr.mxu0 0.0
    %1363 = vmatpush2.msra.mxu0 0.0
    %1364 = vmatprep.subr.mxu0 0.0
    %1365 = vmatpush2.msra.mxu0 0.0
    %1366 = vmatprep.subr.mxu0 0.0
    %1367 = vmatpush2.msra.mxu0 0.0
    %1368 = vmatprep.subr.mxu0 0.0
    %1369 = vmatpush2.msra.mxu0 0.0
    %1370 = vmatprep.subr.mxu0 0.0
    %1371 = vmatpush2.msra.mxu0 0.0
    %1372 = vmatprep.mubr.f32.mxu0 0.0
    %v1373 = vand.u32 %v1136, 4294901760
    %1374 = vmatmul.mubr.f32.gmra.mxu0 %v1373
    %v1375 = vpop.f32.mrf.mxu0
    %v1376 = vadd.f32 %v1225, %v1375
    %v1377 = vpop.f32.mrf.mxu0
    %1378 = vdwg.mxu0
    %1379 = vmatprep.subr.mxu0 0.0
    %v1380 = vand.u32 %v37, 4294901760
    %v1381 = vsub.f32 %v37, %v1380
    %1382 = vmatpush1.msra.mxu0 %v1381
    %1383 = vmatprep.subr.mxu0 0.0
    %v1384 = vand.u32 %v36, 4294901760
    %v1385 = vsub.f32 %v36, %v1384
    %1386 = vmatpush1.msra.mxu0 %v1385
    %1387 = vmatprep.subr.mxu0 0.0
    %v1388 = vand.u32 %v35, 4294901760
    %v1389 = vsub.f32 %v35, %v1388
    %1390 = vmatpush1.msra.mxu0 %v1389
    %1391 = vmatprep.subr.mxu0 0.0
    %v1392 = vand.u32 %v34, 4294901760
    %v1393 = vsub.f32 %v34, %v1392
    %1394 = vmatpush1.msra.mxu0 %v1393
    %1395 = vmatprep.subr.mxu0 0.0
    %v1396 = vand.u32 %v33, 4294901760
    %v1397 = vsub.f32 %v33, %v1396
    %1398 = vmatpush1.msra.mxu0 %v1397
    %1399 = vmatprep.subr.mxu0 0.0
    %v1400 = vand.u32 %v32, 4294901760
    %v1401 = vsub.f32 %v32, %v1400
    %1402 = vmatpush1.msra.mxu0 %v1401
    %1403 = vmatprep.subr.mxu0 0.0
    %v1404 = vand.u32 %v31, 4294901760
    %v1405 = vsub.f32 %v31, %v1404
    %1406 = vmatpush1.msra.mxu0 %v1405
    %1407 = vmatprep.subr.mxu0 0.0
    %v1408 = vand.u32 %v30, 4294901760
    %v1409 = vsub.f32 %v30, %v1408
    %1410 = vmatpush1.msra.mxu0 %v1409
    %1411 = vmatprep.subr.mxu0 0.0
    %v1412 = vand.u32 %v29, 4294901760
    %v1413 = vsub.f32 %v29, %v1412
    %1414 = vmatpush1.msra.mxu0 %v1413
    %1415 = vmatprep.subr.mxu0 0.0
    %v1416 = vand.u32 %v28, 4294901760
    %v1417 = vsub.f32 %v28, %v1416
    %1418 = vmatpush1.msra.mxu0 %v1417
    %1419 = vmatprep.subr.mxu0 0.0
    %v1420 = vand.u32 %v27, 4294901760
    %v1421 = vsub.f32 %v27, %v1420
    %1422 = vmatpush1.msra.mxu0 %v1421
    %1423 = vmatprep.subr.mxu0 0.0
    %v1424 = vand.u32 %v26, 4294901760
    %v1425 = vsub.f32 %v26, %v1424
    %1426 = vmatpush1.msra.mxu0 %v1425
    %1427 = vmatprep.subr.mxu0 0.0
    %v1428 = vand.u32 %v25, 4294901760
    %v1429 = vsub.f32 %v25, %v1428
    %1430 = vmatpush1.msra.mxu0 %v1429
    %1431 = vmatprep.subr.mxu0 0.0
    %v1432 = vand.u32 %v24, 4294901760
    %v1433 = vsub.f32 %v24, %v1432
    %1434 = vmatpush1.msra.mxu0 %v1433
    %1435 = vmatprep.subr.mxu0 0.0
    %v1436 = vand.u32 %v23, 4294901760
    %v1437 = vsub.f32 %v23, %v1436
    %1438 = vmatpush1.msra.mxu0 %v1437
    %1439 = vmatprep.subr.mxu0 0.0
    %v1440 = vand.u32 %v22, 4294901760
    %v1441 = vsub.f32 %v22, %v1440
    %1442 = vmatpush1.msra.mxu0 %v1441
    %1443 = vmatprep.subr.mxu0 0.0
    %1444 = vmatpush2.msra.mxu0 0.0
    %1445 = vmatprep.subr.mxu0 0.0
    %1446 = vmatpush2.msra.mxu0 0.0
    %1447 = vmatprep.subr.mxu0 0.0
    %1448 = vmatpush2.msra.mxu0 0.0
    %1449 = vmatprep.subr.mxu0 0.0
    %1450 = vmatpush2.msra.mxu0 0.0
    %1451 = vmatprep.subr.mxu0 0.0
    %1452 = vmatpush2.msra.mxu0 0.0
    %1453 = vmatprep.subr.mxu0 0.0
    %1454 = vmatpush2.msra.mxu0 0.0
    %1455 = vmatprep.subr.mxu0 0.0
    %1456 = vmatpush2.msra.mxu0 0.0
    %1457 = vmatprep.subr.mxu0 0.0
    %1458 = vmatpush2.msra.mxu0 0.0
    %1459 = vmatprep.subr.mxu0 0.0
    %1460 = vmatpush2.msra.mxu0 0.0
    %1461 = vmatprep.subr.mxu0 0.0
    %1462 = vmatpush2.msra.mxu0 0.0
    %1463 = vmatprep.subr.mxu0 0.0
    %1464 = vmatpush2.msra.mxu0 0.0
    %1465 = vmatprep.subr.mxu0 0.0
    %1466 = vmatpush2.msra.mxu0 0.0
    %1467 = vmatprep.subr.mxu0 0.0
    %1468 = vmatpush2.msra.mxu0 0.0
    %1469 = vmatprep.subr.mxu0 0.0
    %1470 = vmatpush2.msra.mxu0 0.0
    %1471 = vmatprep.subr.mxu0 0.0
    %1472 = vmatpush2.msra.mxu0 0.0
    %1473 = vmatprep.subr.mxu0 0.0
    %1474 = vmatpush2.msra.mxu0 0.0
    %1475 = vmatprep.mubr.f32.mxu0 0.0
    %v1476 = vand.u32 %v1136, 4294901760
    %v1477 = vsub.f32 %v1136, %v1476
    %1478 = vmatmul.mubr.f32.gmra.mxu0 %v1477
    %v1479 = vpop.f32.mrf.mxu0
    %v1480 = vadd.f32 %v1376, %v1479
    %v1481 = vpop.f32.mrf.mxu0
    %1482 = vdwg.mxu0
    %1483 = vmatprep.subr.mxu0 0.0
    %v1484 = vand.u32 %v37, 4294901760
    %1485 = vmatpush1.msra.mxu0 %v1484
    %1486 = vmatprep.subr.mxu0 0.0
    %v1487 = vand.u32 %v36, 4294901760
    %1488 = vmatpush1.msra.mxu0 %v1487
    %1489 = vmatprep.subr.mxu0 0.0
    %v1490 = vand.u32 %v35, 4294901760
    %1491 = vmatpush1.msra.mxu0 %v1490
    %1492 = vmatprep.subr.mxu0 0.0
    %v1493 = vand.u32 %v34, 4294901760
    %1494 = vmatpush1.msra.mxu0 %v1493
    %1495 = vmatprep.subr.mxu0 0.0
    %v1496 = vand.u32 %v33, 4294901760
    %1497 = vmatpush1.msra.mxu0 %v1496
    %1498 = vmatprep.subr.mxu0 0.0
    %v1499 = vand.u32 %v32, 4294901760
    %1500 = vmatpush1.msra.mxu0 %v1499
    %1501 = vmatprep.subr.mxu0 0.0
    %v1502 = vand.u32 %v31, 4294901760
    %1503 = vmatpush1.msra.mxu0 %v1502
    %1504 = vmatprep.subr.mxu0 0.0
    %v1505 = vand.u32 %v30, 4294901760
    %1506 = vmatpush1.msra.mxu0 %v1505
    %1507 = vmatprep.subr.mxu0 0.0
    %v1508 = vand.u32 %v29, 4294901760
    %1509 = vmatpush1.msra.mxu0 %v1508
    %1510 = vmatprep.subr.mxu0 0.0
    %v1511 = vand.u32 %v28, 4294901760
    %1512 = vmatpush1.msra.mxu0 %v1511
    %1513 = vmatprep.subr.mxu0 0.0
    %v1514 = vand.u32 %v27, 4294901760
    %1515 = vmatpush1.msra.mxu0 %v1514
    %1516 = vmatprep.subr.mxu0 0.0
    %v1517 = vand.u32 %v26, 4294901760
    %1518 = vmatpush1.msra.mxu0 %v1517
    %1519 = vmatprep.subr.mxu0 0.0
    %v1520 = vand.u32 %v25, 4294901760
    %1521 = vmatpush1.msra.mxu0 %v1520
    %1522 = vmatprep.subr.mxu0 0.0
    %v1523 = vand.u32 %v24, 4294901760
    %1524 = vmatpush1.msra.mxu0 %v1523
    %1525 = vmatprep.subr.mxu0 0.0
    %v1526 = vand.u32 %v23, 4294901760
    %1527 = vmatpush1.msra.mxu0 %v1526
    %1528 = vmatprep.subr.mxu0 0.0
    %v1529 = vand.u32 %v22, 4294901760
    %1530 = vmatpush1.msra.mxu0 %v1529
    %1531 = vmatprep.subr.mxu0 0.0
    %1532 = vmatpush2.msra.mxu0 0.0
    %1533 = vmatprep.subr.mxu0 0.0
    %1534 = vmatpush2.msra.mxu0 0.0
    %1535 = vmatprep.subr.mxu0 0.0
    %1536 = vmatpush2.msra.mxu0 0.0
    %1537 = vmatprep.subr.mxu0 0.0
    %1538 = vmatpush2.msra.mxu0 0.0
    %1539 = vmatprep.subr.mxu0 0.0
    %1540 = vmatpush2.msra.mxu0 0.0
    %1541 = vmatprep.subr.mxu0 0.0
    %1542 = vmatpush2.msra.mxu0 0.0
    %1543 = vmatprep.subr.mxu0 0.0
    %1544 = vmatpush2.msra.mxu0 0.0
    %1545 = vmatprep.subr.mxu0 0.0
    %1546 = vmatpush2.msra.mxu0 0.0
    %1547 = vmatprep.subr.mxu0 0.0
    %1548 = vmatpush2.msra.mxu0 0.0
    %1549 = vmatprep.subr.mxu0 0.0
    %1550 = vmatpush2.msra.mxu0 0.0
    %1551 = vmatprep.subr.mxu0 0.0
    %1552 = vmatpush2.msra.mxu0 0.0
    %1553 = vmatprep.subr.mxu0 0.0
    %1554 = vmatpush2.msra.mxu0 0.0
    %1555 = vmatprep.subr.mxu0 0.0
    %1556 = vmatpush2.msra.mxu0 0.0
    %1557 = vmatprep.subr.mxu0 0.0
    %1558 = vmatpush2.msra.mxu0 0.0
    %1559 = vmatprep.subr.mxu0 0.0
    %1560 = vmatpush2.msra.mxu0 0.0
    %1561 = vmatprep.subr.mxu0 0.0
    %1562 = vmatpush2.msra.mxu0 0.0
    %1563 = vmatprep.mubr.f32.mxu0 0.0
    %v1564 = vand.u32 %v1136, 4294901760
    %v1565 = vsub.f32 %v1136, %v1564
    %v1566 = vand.u32 %v1565, 4294901760
    %1567 = vmatmul.mubr.f32.gmra.mxu0 %v1566
    %v1568 = vpop.f32.mrf.mxu0
    %v1569 = vadd.f32 %v1480, %v1568
    %v1570 = vpop.f32.mrf.mxu0
    %1571 = vdwg.mxu0
    %1572 = vmatprep.subr.mxu0 0.0
    %v1573 = vand.u32 %v37, 4294901760
    %v1574 = vsub.f32 %v37, %v1573
    %v1575 = vand.u32 %v1574, 4294901760
    %1576 = vmatpush1.msra.mxu0 %v1575
    %1577 = vmatprep.subr.mxu0 0.0
    %v1578 = vand.u32 %v36, 4294901760
    %v1579 = vsub.f32 %v36, %v1578
    %v1580 = vand.u32 %v1579, 4294901760
    %1581 = vmatpush1.msra.mxu0 %v1580
    %1582 = vmatprep.subr.mxu0 0.0
    %v1583 = vand.u32 %v35, 4294901760
    %v1584 = vsub.f32 %v35, %v1583
    %v1585 = vand.u32 %v1584, 4294901760
    %1586 = vmatpush1.msra.mxu0 %v1585
    %1587 = vmatprep.subr.mxu0 0.0
    %v1588 = vand.u32 %v34, 4294901760
    %v1589 = vsub.f32 %v34, %v1588
    %v1590 = vand.u32 %v1589, 4294901760
    %1591 = vmatpush1.msra.mxu0 %v1590
    %1592 = vmatprep.subr.mxu0 0.0
    %v1593 = vand.u32 %v33, 4294901760
    %v1594 = vsub.f32 %v33, %v1593
    %v1595 = vand.u32 %v1594, 4294901760
    %1596 = vmatpush1.msra.mxu0 %v1595
    %1597 = vmatprep.subr.mxu0 0.0
    %v1598 = vand.u32 %v32, 4294901760
    %v1599 = vsub.f32 %v32, %v1598
    %v1600 = vand.u32 %v1599, 4294901760
    %1601 = vmatpush1.msra.mxu0 %v1600
    %1602 = vmatprep.subr.mxu0 0.0
    %v1603 = vand.u32 %v31, 4294901760
    %v1604 = vsub.f32 %v31, %v1603
    %v1605 = vand.u32 %v1604, 4294901760
    %1606 = vmatpush1.msra.mxu0 %v1605
    %1607 = vmatprep.subr.mxu0 0.0
    %v1608 = vand.u32 %v30, 4294901760
    %v1609 = vsub.f32 %v30, %v1608
    %v1610 = vand.u32 %v1609, 4294901760
    %1611 = vmatpush1.msra.mxu0 %v1610
    %1612 = vmatprep.subr.mxu0 0.0
    %v1613 = vand.u32 %v29, 4294901760
    %v1614 = vsub.f32 %v29, %v1613
    %v1615 = vand.u32 %v1614, 4294901760
    %1616 = vmatpush1.msra.mxu0 %v1615
    %1617 = vmatprep.subr.mxu0 0.0
    %v1618 = vand.u32 %v28, 4294901760
    %v1619 = vsub.f32 %v28, %v1618
    %v1620 = vand.u32 %v1619, 4294901760
    %1621 = vmatpush1.msra.mxu0 %v1620
    %1622 = vmatprep.subr.mxu0 0.0
    %v1623 = vand.u32 %v27, 4294901760
    %v1624 = vsub.f32 %v27, %v1623
    %v1625 = vand.u32 %v1624, 4294901760
    %1626 = vmatpush1.msra.mxu0 %v1625
    %1627 = vmatprep.subr.mxu0 0.0
    %v1628 = vand.u32 %v26, 4294901760
    %v1629 = vsub.f32 %v26, %v1628
    %v1630 = vand.u32 %v1629, 4294901760
    %1631 = vmatpush1.msra.mxu0 %v1630
    %1632 = vmatprep.subr.mxu0 0.0
    %v1633 = vand.u32 %v25, 4294901760
    %v1634 = vsub.f32 %v25, %v1633
    %v1635 = vand.u32 %v1634, 4294901760
    %1636 = vmatpush1.msra.mxu0 %v1635
    %1637 = vmatprep.subr.mxu0 0.0
    %v1638 = vand.u32 %v24, 4294901760
    %v1639 = vsub.f32 %v24, %v1638
    %v1640 = vand.u32 %v1639, 4294901760
    %1641 = vmatpush1.msra.mxu0 %v1640
    %1642 = vmatprep.subr.mxu0 0.0
    %v1643 = vand.u32 %v23, 4294901760
    %v1644 = vsub.f32 %v23, %v1643
    %v1645 = vand.u32 %v1644, 4294901760
    %1646 = vmatpush1.msra.mxu0 %v1645
    %1647 = vmatprep.subr.mxu0 0.0
    %v1648 = vand.u32 %v22, 4294901760
    %v1649 = vsub.f32 %v22, %v1648
    %v1650 = vand.u32 %v1649, 4294901760
    %1651 = vmatpush1.msra.mxu0 %v1650
    %1652 = vmatprep.subr.mxu0 0.0
    %1653 = vmatpush2.msra.mxu0 0.0
    %1654 = vmatprep.subr.mxu0 0.0
    %1655 = vmatpush2.msra.mxu0 0.0
    %1656 = vmatprep.subr.mxu0 0.0
    %1657 = vmatpush2.msra.mxu0 0.0
    %1658 = vmatprep.subr.mxu0 0.0
    %1659 = vmatpush2.msra.mxu0 0.0
    %1660 = vmatprep.subr.mxu0 0.0
    %1661 = vmatpush2.msra.mxu0 0.0
    %1662 = vmatprep.subr.mxu0 0.0
    %1663 = vmatpush2.msra.mxu0 0.0
    %1664 = vmatprep.subr.mxu0 0.0
    %1665 = vmatpush2.msra.mxu0 0.0
    %1666 = vmatprep.subr.mxu0 0.0
    %1667 = vmatpush2.msra.mxu0 0.0
    %1668 = vmatprep.subr.mxu0 0.0
    %1669 = vmatpush2.msra.mxu0 0.0
    %1670 = vmatprep.subr.mxu0 0.0
    %1671 = vmatpush2.msra.mxu0 0.0
    %1672 = vmatprep.subr.mxu0 0.0
    %1673 = vmatpush2.msra.mxu0 0.0
    %1674 = vmatprep.subr.mxu0 0.0
    %1675 = vmatpush2.msra.mxu0 0.0
    %1676 = vmatprep.subr.mxu0 0.0
    %1677 = vmatpush2.msra.mxu0 0.0
    %1678 = vmatprep.subr.mxu0 0.0
    %1679 = vmatpush2.msra.mxu0 0.0
    %1680 = vmatprep.subr.mxu0 0.0
    %1681 = vmatpush2.msra.mxu0 0.0
    %1682 = vmatprep.subr.mxu0 0.0
    %1683 = vmatpush2.msra.mxu0 0.0
    %1684 = vmatprep.mubr.f32.mxu0 0.0
    %v1685 = vand.u32 %v1136, 4294901760
    %1686 = vmatmul.mubr.f32.gmra.mxu0 %v1685
    %v1687 = vpop.f32.mrf.mxu0
    %v1688 = vadd.f32 %v1569, %v1687
    %v1689 = vpop.f32.mrf.mxu0
    %1690 = vdwg.mxu0
    %1691 = vmatprep.subr.mxu0 0.0
    %v1692 = vand.u32 %v37, 4294901760
    %1693 = vmatpush1.msra.mxu0 %v1692
    %1694 = vmatprep.subr.mxu0 0.0
    %v1695 = vand.u32 %v36, 4294901760
    %1696 = vmatpush1.msra.mxu0 %v1695
    %1697 = vmatprep.subr.mxu0 0.0
    %v1698 = vand.u32 %v35, 4294901760
    %1699 = vmatpush1.msra.mxu0 %v1698
    %1700 = vmatprep.subr.mxu0 0.0
    %v1701 = vand.u32 %v34, 4294901760
    %1702 = vmatpush1.msra.mxu0 %v1701
    %1703 = vmatprep.subr.mxu0 0.0
    %v1704 = vand.u32 %v33, 4294901760
    %1705 = vmatpush1.msra.mxu0 %v1704
    %1706 = vmatprep.subr.mxu0 0.0
    %v1707 = vand.u32 %v32, 4294901760
    %1708 = vmatpush1.msra.mxu0 %v1707
    %1709 = vmatprep.subr.mxu0 0.0
    %v1710 = vand.u32 %v31, 4294901760
    %1711 = vmatpush1.msra.mxu0 %v1710
    %1712 = vmatprep.subr.mxu0 0.0
    %v1713 = vand.u32 %v30, 4294901760
    %1714 = vmatpush1.msra.mxu0 %v1713
    %1715 = vmatprep.subr.mxu0 0.0
    %v1716 = vand.u32 %v29, 4294901760
    %1717 = vmatpush1.msra.mxu0 %v1716
    %1718 = vmatprep.subr.mxu0 0.0
    %v1719 = vand.u32 %v28, 4294901760
    %1720 = vmatpush1.msra.mxu0 %v1719
    %1721 = vmatprep.subr.mxu0 0.0
    %v1722 = vand.u32 %v27, 4294901760
    %1723 = vmatpush1.msra.mxu0 %v1722
    %1724 = vmatprep.subr.mxu0 0.0
    %v1725 = vand.u32 %v26, 4294901760
    %1726 = vmatpush1.msra.mxu0 %v1725
    %1727 = vmatprep.subr.mxu0 0.0
    %v1728 = vand.u32 %v25, 4294901760
    %1729 = vmatpush1.msra.mxu0 %v1728
    %1730 = vmatprep.subr.mxu0 0.0
    %v1731 = vand.u32 %v24, 4294901760
    %1732 = vmatpush1.msra.mxu0 %v1731
    %1733 = vmatprep.subr.mxu0 0.0
    %v1734 = vand.u32 %v23, 4294901760
    %1735 = vmatpush1.msra.mxu0 %v1734
    %1736 = vmatprep.subr.mxu0 0.0
    %v1737 = vand.u32 %v22, 4294901760
    %1738 = vmatpush1.msra.mxu0 %v1737
    %1739 = vmatprep.subr.mxu0 0.0
    %1740 = vmatpush2.msra.mxu0 0.0
    %1741 = vmatprep.subr.mxu0 0.0
    %1742 = vmatpush2.msra.mxu0 0.0
    %1743 = vmatprep.subr.mxu0 0.0
    %1744 = vmatpush2.msra.mxu0 0.0
    %1745 = vmatprep.subr.mxu0 0.0
    %1746 = vmatpush2.msra.mxu0 0.0
    %1747 = vmatprep.subr.mxu0 0.0
    %1748 = vmatpush2.msra.mxu0 0.0
    %1749 = vmatprep.subr.mxu0 0.0
    %1750 = vmatpush2.msra.mxu0 0.0
    %1751 = vmatprep.subr.mxu0 0.0
    %1752 = vmatpush2.msra.mxu0 0.0
    %1753 = vmatprep.subr.mxu0 0.0
    %1754 = vmatpush2.msra.mxu0 0.0
    %1755 = vmatprep.subr.mxu0 0.0
    %1756 = vmatpush2.msra.mxu0 0.0
    %1757 = vmatprep.subr.mxu0 0.0
    %1758 = vmatpush2.msra.mxu0 0.0
    %1759 = vmatprep.subr.mxu0 0.0
    %1760 = vmatpush2.msra.mxu0 0.0
    %1761 = vmatprep.subr.mxu0 0.0
    %1762 = vmatpush2.msra.mxu0 0.0
    %1763 = vmatprep.subr.mxu0 0.0
    %1764 = vmatpush2.msra.mxu0 0.0
    %1765 = vmatprep.subr.mxu0 0.0
    %1766 = vmatpush2.msra.mxu0 0.0
    %1767 = vmatprep.subr.mxu0 0.0
    %1768 = vmatpush2.msra.mxu0 0.0
    %1769 = vmatprep.subr.mxu0 0.0
    %1770 = vmatpush2.msra.mxu0 0.0
    %1771 = vmatprep.mubr.f32.mxu0 0.0
    %v1772 = vand.u32 %v1136, 4294901760
    %1773 = vmatmul.mubr.f32.gmra.mxu0 %v1772
    %v1774 = vpop.f32.mrf.mxu0
    %v1775 = vadd.f32 %v1688, %v1774
    %v1776 = vpop.f32.mrf.mxu0
    %1777 = vdwg.mxu0
    %v1779 = vsel %vm680, %v1775, 0
    %1781 = vmatprep.subr.mxu0 0.0
    %1782 = vmatpush1.msra.mxu0 0.0
    %1783 = vmatprep.subr.mxu0 0.0
    %1784 = vmatpush1.msra.mxu0 0.0
    %1785 = vmatprep.subr.mxu0 0.0
    %1786 = vmatpush1.msra.mxu0 0.0
    %1787 = vmatprep.subr.mxu0 0.0
    %1788 = vmatpush1.msra.mxu0 0.0
    %1789 = vmatprep.subr.mxu0 0.0
    %1790 = vmatpush1.msra.mxu0 0.0
    %1791 = vmatprep.subr.mxu0 0.0
    %1792 = vmatpush1.msra.mxu0 0.0
    %1793 = vmatprep.subr.mxu0 0.0
    %1794 = vmatpush1.msra.mxu0 0.0
    %1795 = vmatprep.subr.mxu0 0.0
    %1796 = vmatpush1.msra.mxu0 0.0
    %1797 = vmatprep.subr.mxu0 0.0
    %1798 = vmatpush1.msra.mxu0 0.0
    %1799 = vmatprep.subr.mxu0 0.0
    %1800 = vmatpush1.msra.mxu0 0.0
    %1801 = vmatprep.subr.mxu0 0.0
    %1802 = vmatpush1.msra.mxu0 0.0
    %1803 = vmatprep.subr.mxu0 0.0
    %1804 = vmatpush1.msra.mxu0 0.0
    %1805 = vmatprep.subr.mxu0 0.0
    %1806 = vmatpush1.msra.mxu0 0.0
    %1807 = vmatprep.subr.mxu0 0.0
    %1808 = vmatpush1.msra.mxu0 0.0
    %1809 = vmatprep.subr.mxu0 0.0
    %1810 = vmatpush1.msra.mxu0 0.0
    %1811 = vmatprep.subr.mxu0 0.0
    %v1812 = vand.u32 %v686, 4294901760
    %1813 = vmatpush1.msra.mxu0 %v1812
    %1814 = vmatprep.subr.mxu0 0.0
    %1815 = vmatpush2.msra.mxu0 0.0
    %1816 = vmatprep.subr.mxu0 0.0
    %1817 = vmatpush2.msra.mxu0 0.0
    %1818 = vmatprep.subr.mxu0 0.0
    %1819 = vmatpush2.msra.mxu0 0.0
    %1820 = vmatprep.subr.mxu0 0.0
    %1821 = vmatpush2.msra.mxu0 0.0
    %1822 = vmatprep.subr.mxu0 0.0
    %1823 = vmatpush2.msra.mxu0 0.0
    %1824 = vmatprep.subr.mxu0 0.0
    %1825 = vmatpush2.msra.mxu0 0.0
    %1826 = vmatprep.subr.mxu0 0.0
    %1827 = vmatpush2.msra.mxu0 0.0
    %1828 = vmatprep.subr.mxu0 0.0
    %1829 = vmatpush2.msra.mxu0 0.0
    %1830 = vmatprep.subr.mxu0 0.0
    %1831 = vmatpush2.msra.mxu0 0.0
    %1832 = vmatprep.subr.mxu0 0.0
    %1833 = vmatpush2.msra.mxu0 0.0
    %1834 = vmatprep.subr.mxu0 0.0
    %1835 = vmatpush2.msra.mxu0 0.0
    %1836 = vmatprep.subr.mxu0 0.0
    %1837 = vmatpush2.msra.mxu0 0.0
    %1838 = vmatprep.subr.mxu0 0.0
    %1839 = vmatpush2.msra.mxu0 0.0
    %1840 = vmatprep.subr.mxu0 0.0
    %1841 = vmatpush2.msra.mxu0 0.0
    %1842 = vmatprep.subr.mxu0 0.0
    %1843 = vmatpush2.msra.mxu0 0.0
    %1844 = vmatprep.subr.mxu0 0.0
    %1845 = vmatpush2.msra.mxu0 0.0
    %1846 = vmatprep.mubr.f32.mxu0 0.0
    %v1847 = vand.u32 %v1779, 4294901760
    %v1848 = vsub.f32 %v1779, %v1847
    %v1849 = vand.u32 %v1848, 4294901760
    %v1850 = vsub.f32 %v1848, %v1849
    %v1851 = vand.u32 %v1850, 4294901760
    %1852 = vmatmul.mubr.f32.gmra.mxu0 %v1851
    %v1853 = vpop.f32.mrf.mxu0
    %v1854 = vadd.f32 0.0, %v1853
    %v1855 = vpop.f32.mrf.mxu0
    %1856 = vdwg.mxu0
    %1857 = vmatprep.subr.mxu0 0.0
    %1858 = vmatpush1.msra.mxu0 0.0
    %1859 = vmatprep.subr.mxu0 0.0
    %1860 = vmatpush1.msra.mxu0 0.0
    %1861 = vmatprep.subr.mxu0 0.0
    %1862 = vmatpush1.msra.mxu0 0.0
    %1863 = vmatprep.subr.mxu0 0.0
    %1864 = vmatpush1.msra.mxu0 0.0
    %1865 = vmatprep.subr.mxu0 0.0
    %1866 = vmatpush1.msra.mxu0 0.0
    %1867 = vmatprep.subr.mxu0 0.0
    %1868 = vmatpush1.msra.mxu0 0.0
    %1869 = vmatprep.subr.mxu0 0.0
    %1870 = vmatpush1.msra.mxu0 0.0
    %1871 = vmatprep.subr.mxu0 0.0
    %1872 = vmatpush1.msra.mxu0 0.0
    %1873 = vmatprep.subr.mxu0 0.0
    %1874 = vmatpush1.msra.mxu0 0.0
    %1875 = vmatprep.subr.mxu0 0.0
    %1876 = vmatpush1.msra.mxu0 0.0
    %1877 = vmatprep.subr.mxu0 0.0
    %1878 = vmatpush1.msra.mxu0 0.0
    %1879 = vmatprep.subr.mxu0 0.0
    %1880 = vmatpush1.msra.mxu0 0.0
    %1881 = vmatprep.subr.mxu0 0.0
    %1882 = vmatpush1.msra.mxu0 0.0
    %1883 = vmatprep.subr.mxu0 0.0
    %1884 = vmatpush1.msra.mxu0 0.0
    %1885 = vmatprep.subr.mxu0 0.0
    %1886 = vmatpush1.msra.mxu0 0.0
    %1887 = vmatprep.subr.mxu0 0.0
    %v1888 = vand.u32 %v686, 4294901760
    %v1889 = vsub.f32 %v686, %v1888
    %v1890 = vand.u32 %v1889, 4294901760
    %v1891 = vsub.f32 %v1889, %v1890
    %v1892 = vand.u32 %v1891, 4294901760
    %1893 = vmatpush1.msra.mxu0 %v1892
    %1894 = vmatprep.subr.mxu0 0.0
    %1895 = vmatpush2.msra.mxu0 0.0
    %1896 = vmatprep.subr.mxu0 0.0
    %1897 = vmatpush2.msra.mxu0 0.0
    %1898 = vmatprep.subr.mxu0 0.0
    %1899 = vmatpush2.msra.mxu0 0.0
    %1900 = vmatprep.subr.mxu0 0.0
    %1901 = vmatpush2.msra.mxu0 0.0
    %1902 = vmatprep.subr.mxu0 0.0
    %1903 = vmatpush2.msra.mxu0 0.0
    %1904 = vmatprep.subr.mxu0 0.0
    %1905 = vmatpush2.msra.mxu0 0.0
    %1906 = vmatprep.subr.mxu0 0.0
    %1907 = vmatpush2.msra.mxu0 0.0
    %1908 = vmatprep.subr.mxu0 0.0
    %1909 = vmatpush2.msra.mxu0 0.0
    %1910 = vmatprep.subr.mxu0 0.0
    %1911 = vmatpush2.msra.mxu0 0.0
    %1912 = vmatprep.subr.mxu0 0.0
    %1913 = vmatpush2.msra.mxu0 0.0
    %1914 = vmatprep.subr.mxu0 0.0
    %1915 = vmatpush2.msra.mxu0 0.0
    %1916 = vmatprep.subr.mxu0 0.0
    %1917 = vmatpush2.msra.mxu0 0.0
    %1918 = vmatprep.subr.mxu0 0.0
    %1919 = vmatpush2.msra.mxu0 0.0
    %1920 = vmatprep.subr.mxu0 0.0
    %1921 = vmatpush2.msra.mxu0 0.0
    %1922 = vmatprep.subr.mxu0 0.0
    %1923 = vmatpush2.msra.mxu0 0.0
    %1924 = vmatprep.subr.mxu0 0.0
    %1925 = vmatpush2.msra.mxu0 0.0
    %1926 = vmatprep.mubr.f32.mxu0 0.0
    %v1927 = vand.u32 %v1779, 4294901760
    %1928 = vmatmul.mubr.f32.gmra.mxu0 %v1927
    %v1929 = vpop.f32.mrf.mxu0
    %v1930 = vadd.f32 %v1854, %v1929
    %v1931 = vpop.f32.mrf.mxu0
    %1932 = vdwg.mxu0
    %1933 = vmatprep.subr.mxu0 0.0
    %1934 = vmatpush1.msra.mxu0 0.0
    %1935 = vmatprep.subr.mxu0 0.0
    %1936 = vmatpush1.msra.mxu0 0.0
    %1937 = vmatprep.subr.mxu0 0.0
    %1938 = vmatpush1.msra.mxu0 0.0
    %1939 = vmatprep.subr.mxu0 0.0
    %1940 = vmatpush1.msra.mxu0 0.0
    %1941 = vmatprep.subr.mxu0 0.0
    %1942 = vmatpush1.msra.mxu0 0.0
    %1943 = vmatprep.subr.mxu0 0.0
    %1944 = vmatpush1.msra.mxu0 0.0
    %1945 = vmatprep.subr.mxu0 0.0
    %1946 = vmatpush1.msra.mxu0 0.0
    %1947 = vmatprep.subr.mxu0 0.0
    %1948 = vmatpush1.msra.mxu0 0.0
    %1949 = vmatprep.subr.mxu0 0.0
    %1950 = vmatpush1.msra.mxu0 0.0
    %1951 = vmatprep.subr.mxu0 0.0
    %1952 = vmatpush1.msra.mxu0 0.0
    %1953 = vmatprep.subr.mxu0 0.0
    %1954 = vmatpush1.msra.mxu0 0.0
    %1955 = vmatprep.subr.mxu0 0.0
    %1956 = vmatpush1.msra.mxu0 0.0
    %1957 = vmatprep.subr.mxu0 0.0
    %1958 = vmatpush1.msra.mxu0 0.0
    %1959 = vmatprep.subr.mxu0 0.0
    %1960 = vmatpush1.msra.mxu0 0.0
    %1961 = vmatprep.subr.mxu0 0.0
    %1962 = vmatpush1.msra.mxu0 0.0
    %1963 = vmatprep.subr.mxu0 0.0
    %v1964 = vand.u32 %v686, 4294901760
    %v1965 = vsub.f32 %v686, %v1964
    %1966 = vmatpush1.msra.mxu0 %v1965
    %1967 = vmatprep.subr.mxu0 0.0
    %1968 = vmatpush2.msra.mxu0 0.0
    %1969 = vmatprep.subr.mxu0 0.0
    %1970 = vmatpush2.msra.mxu0 0.0
    %1971 = vmatprep.subr.mxu0 0.0
    %1972 = vmatpush2.msra.mxu0 0.0
    %1973 = vmatprep.subr.mxu0 0.0
    %1974 = vmatpush2.msra.mxu0 0.0
    %1975 = vmatprep.subr.mxu0 0.0
    %1976 = vmatpush2.msra.mxu0 0.0
    %1977 = vmatprep.subr.mxu0 0.0
    %1978 = vmatpush2.msra.mxu0 0.0
    %1979 = vmatprep.subr.mxu0 0.0
    %1980 = vmatpush2.msra.mxu0 0.0
    %1981 = vmatprep.subr.mxu0 0.0
    %1982 = vmatpush2.msra.mxu0 0.0
    %1983 = vmatprep.subr.mxu0 0.0
    %1984 = vmatpush2.msra.mxu0 0.0
    %1985 = vmatprep.subr.mxu0 0.0
    %1986 = vmatpush2.msra.mxu0 0.0
    %1987 = vmatprep.subr.mxu0 0.0
    %1988 = vmatpush2.msra.mxu0 0.0
    %1989 = vmatprep.subr.mxu0 0.0
    %1990 = vmatpush2.msra.mxu0 0.0
    %1991 = vmatprep.subr.mxu0 0.0
    %1992 = vmatpush2.msra.mxu0 0.0
    %1993 = vmatprep.subr.mxu0 0.0
    %1994 = vmatpush2.msra.mxu0 0.0
    %1995 = vmatprep.subr.mxu0 0.0
    %1996 = vmatpush2.msra.mxu0 0.0
    %1997 = vmatprep.subr.mxu0 0.0
    %1998 = vmatpush2.msra.mxu0 0.0
    %1999 = vmatprep.mubr.f32.mxu0 0.0
    %v2000 = vand.u32 %v1779, 4294901760
    %v2001 = vsub.f32 %v1779, %v2000
    %2002 = vmatmul.mubr.f32.gmra.mxu0 %v2001
    %v2003 = vpop.f32.mrf.mxu0
    %v2004 = vadd.f32 %v1930, %v2003
    %v2005 = vpop.f32.mrf.mxu0
    %2006 = vdwg.mxu0
    %2007 = vmatprep.subr.mxu0 0.0
    %2008 = vmatpush1.msra.mxu0 0.0
    %2009 = vmatprep.subr.mxu0 0.0
    %2010 = vmatpush1.msra.mxu0 0.0
    %2011 = vmatprep.subr.mxu0 0.0
    %2012 = vmatpush1.msra.mxu0 0.0
    %2013 = vmatprep.subr.mxu0 0.0
    %2014 = vmatpush1.msra.mxu0 0.0
    %2015 = vmatprep.subr.mxu0 0.0
    %2016 = vmatpush1.msra.mxu0 0.0
    %2017 = vmatprep.subr.mxu0 0.0
    %2018 = vmatpush1.msra.mxu0 0.0
    %2019 = vmatprep.subr.mxu0 0.0
    %2020 = vmatpush1.msra.mxu0 0.0
    %2021 = vmatprep.subr.mxu0 0.0
    %2022 = vmatpush1.msra.mxu0 0.0
    %2023 = vmatprep.subr.mxu0 0.0
    %2024 = vmatpush1.msra.mxu0 0.0
    %2025 = vmatprep.subr.mxu0 0.0
    %2026 = vmatpush1.msra.mxu0 0.0
    %2027 = vmatprep.subr.mxu0 0.0
    %2028 = vmatpush1.msra.mxu0 0.0
    %2029 = vmatprep.subr.mxu0 0.0
    %2030 = vmatpush1.msra.mxu0 0.0
    %2031 = vmatprep.subr.mxu0 0.0
    %2032 = vmatpush1.msra.mxu0 0.0
    %2033 = vmatprep.subr.mxu0 0.0
    %2034 = vmatpush1.msra.mxu0 0.0
    %2035 = vmatprep.subr.mxu0 0.0
    %2036 = vmatpush1.msra.mxu0 0.0
    %2037 = vmatprep.subr.mxu0 0.0
    %v2038 = vand.u32 %v686, 4294901760
    %2039 = vmatpush1.msra.mxu0 %v2038
    %2040 = vmatprep.subr.mxu0 0.0
    %2041 = vmatpush2.msra.mxu0 0.0
    %2042 = vmatprep.subr.mxu0 0.0
    %2043 = vmatpush2.msra.mxu0 0.0
    %2044 = vmatprep.subr.mxu0 0.0
    %2045 = vmatpush2.msra.mxu0 0.0
    %2046 = vmatprep.subr.mxu0 0.0
    %2047 = vmatpush2.msra.mxu0 0.0
    %2048 = vmatprep.subr.mxu0 0.0
    %2049 = vmatpush2.msra.mxu0 0.0
    %2050 = vmatprep.subr.mxu0 0.0
    %2051 = vmatpush2.msra.mxu0 0.0
    %2052 = vmatprep.subr.mxu0 0.0
    %2053 = vmatpush2.msra.mxu0 0.0
    %2054 = vmatprep.subr.mxu0 0.0
    %2055 = vmatpush2.msra.mxu0 0.0
    %2056 = vmatprep.subr.mxu0 0.0
    %2057 = vmatpush2.msra.mxu0 0.0
    %2058 = vmatprep.subr.mxu0 0.0
    %2059 = vmatpush2.msra.mxu0 0.0
    %2060 = vmatprep.subr.mxu0 0.0
    %2061 = vmatpush2.msra.mxu0 0.0
    %2062 = vmatprep.subr.mxu0 0.0
    %2063 = vmatpush2.msra.mxu0 0.0
    %2064 = vmatprep.subr.mxu0 0.0
    %2065 = vmatpush2.msra.mxu0 0.0
    %2066 = vmatprep.subr.mxu0 0.0
    %2067 = vmatpush2.msra.mxu0 0.0
    %2068 = vmatprep.subr.mxu0 0.0
    %2069 = vmatpush2.msra.mxu0 0.0
    %2070 = vmatprep.subr.mxu0 0.0
    %2071 = vmatpush2.msra.mxu0 0.0
    %2072 = vmatprep.mubr.f32.mxu0 0.0
    %v2073 = vand.u32 %v1779, 4294901760
    %v2074 = vsub.f32 %v1779, %v2073
    %v2075 = vand.u32 %v2074, 4294901760
    %2076 = vmatmul.mubr.f32.gmra.mxu0 %v2075
    %v2077 = vpop.f32.mrf.mxu0
    %v2078 = vadd.f32 %v2004, %v2077
    %v2079 = vpop.f32.mrf.mxu0
    %2080 = vdwg.mxu0
    %2081 = vmatprep.subr.mxu0 0.0
    %2082 = vmatpush1.msra.mxu0 0.0
    %2083 = vmatprep.subr.mxu0 0.0
    %2084 = vmatpush1.msra.mxu0 0.0
    %2085 = vmatprep.subr.mxu0 0.0
    %2086 = vmatpush1.msra.mxu0 0.0
    %2087 = vmatprep.subr.mxu0 0.0
    %2088 = vmatpush1.msra.mxu0 0.0
    %2089 = vmatprep.subr.mxu0 0.0
    %2090 = vmatpush1.msra.mxu0 0.0
    %2091 = vmatprep.subr.mxu0 0.0
    %2092 = vmatpush1.msra.mxu0 0.0
    %2093 = vmatprep.subr.mxu0 0.0
    %2094 = vmatpush1.msra.mxu0 0.0
    %2095 = vmatprep.subr.mxu0 0.0
    %2096 = vmatpush1.msra.mxu0 0.0
    %2097 = vmatprep.subr.mxu0 0.0
    %2098 = vmatpush1.msra.mxu0 0.0
    %2099 = vmatprep.subr.mxu0 0.0
    %2100 = vmatpush1.msra.mxu0 0.0
    %2101 = vmatprep.subr.mxu0 0.0
    %2102 = vmatpush1.msra.mxu0 0.0
    %2103 = vmatprep.subr.mxu0 0.0
    %2104 = vmatpush1.msra.mxu0 0.0
    %2105 = vmatprep.subr.mxu0 0.0
    %2106 = vmatpush1.msra.mxu0 0.0
    %2107 = vmatprep.subr.mxu0 0.0
    %2108 = vmatpush1.msra.mxu0 0.0
    %2109 = vmatprep.subr.mxu0 0.0
    %2110 = vmatpush1.msra.mxu0 0.0
    %2111 = vmatprep.subr.mxu0 0.0
    %v2112 = vand.u32 %v686, 4294901760
    %v2113 = vsub.f32 %v686, %v2112
    %v2114 = vand.u32 %v2113, 4294901760
    %2115 = vmatpush1.msra.mxu0 %v2114
    %2116 = vmatprep.subr.mxu0 0.0
    %2117 = vmatpush2.msra.mxu0 0.0
    %2118 = vmatprep.subr.mxu0 0.0
    %2119 = vmatpush2.msra.mxu0 0.0
    %2120 = vmatprep.subr.mxu0 0.0
    %2121 = vmatpush2.msra.mxu0 0.0
    %2122 = vmatprep.subr.mxu0 0.0
    %2123 = vmatpush2.msra.mxu0 0.0
    %2124 = vmatprep.subr.mxu0 0.0
    %2125 = vmatpush2.msra.mxu0 0.0
    %2126 = vmatprep.subr.mxu0 0.0
    %2127 = vmatpush2.msra.mxu0 0.0
    %2128 = vmatprep.subr.mxu0 0.0
    %2129 = vmatpush2.msra.mxu0 0.0
    %2130 = vmatprep.subr.mxu0 0.0
    %2131 = vmatpush2.msra.mxu0 0.0
    %2132 = vmatprep.subr.mxu0 0.0
    %2133 = vmatpush2.msra.mxu0 0.0
    %2134 = vmatprep.subr.mxu0 0.0
    %2135 = vmatpush2.msra.mxu0 0.0
    %2136 = vmatprep.subr.mxu0 0.0
    %2137 = vmatpush2.msra.mxu0 0.0
    %2138 = vmatprep.subr.mxu0 0.0
    %2139 = vmatpush2.msra.mxu0 0.0
    %2140 = vmatprep.subr.mxu0 0.0
    %2141 = vmatpush2.msra.mxu0 0.0
    %2142 = vmatprep.subr.mxu0 0.0
    %2143 = vmatpush2.msra.mxu0 0.0
    %2144 = vmatprep.subr.mxu0 0.0
    %2145 = vmatpush2.msra.mxu0 0.0
    %2146 = vmatprep.subr.mxu0 0.0
    %2147 = vmatpush2.msra.mxu0 0.0
    %2148 = vmatprep.mubr.f32.mxu0 0.0
    %v2149 = vand.u32 %v1779, 4294901760
    %2150 = vmatmul.mubr.f32.gmra.mxu0 %v2149
    %v2151 = vpop.f32.mrf.mxu0
    %v2152 = vadd.f32 %v2078, %v2151
    %v2153 = vpop.f32.mrf.mxu0
    %2154 = vdwg.mxu0
    %2155 = vmatprep.subr.mxu0 0.0
    %2156 = vmatpush1.msra.mxu0 0.0
    %2157 = vmatprep.subr.mxu0 0.0
    %2158 = vmatpush1.msra.mxu0 0.0
    %2159 = vmatprep.subr.mxu0 0.0
    %2160 = vmatpush1.msra.mxu0 0.0
    %2161 = vmatprep.subr.mxu0 0.0
    %2162 = vmatpush1.msra.mxu0 0.0
    %2163 = vmatprep.subr.mxu0 0.0
    %2164 = vmatpush1.msra.mxu0 0.0
    %2165 = vmatprep.subr.mxu0 0.0
    %2166 = vmatpush1.msra.mxu0 0.0
    %2167 = vmatprep.subr.mxu0 0.0
    %2168 = vmatpush1.msra.mxu0 0.0
    %2169 = vmatprep.subr.mxu0 0.0
    %2170 = vmatpush1.msra.mxu0 0.0
    %2171 = vmatprep.subr.mxu0 0.0
    %2172 = vmatpush1.msra.mxu0 0.0
    %2173 = vmatprep.subr.mxu0 0.0
    %2174 = vmatpush1.msra.mxu0 0.0
    %2175 = vmatprep.subr.mxu0 0.0
    %2176 = vmatpush1.msra.mxu0 0.0
    %2177 = vmatprep.subr.mxu0 0.0
    %2178 = vmatpush1.msra.mxu0 0.0
    %2179 = vmatprep.subr.mxu0 0.0
    %2180 = vmatpush1.msra.mxu0 0.0
    %2181 = vmatprep.subr.mxu0 0.0
    %2182 = vmatpush1.msra.mxu0 0.0
    %2183 = vmatprep.subr.mxu0 0.0
    %2184 = vmatpush1.msra.mxu0 0.0
    %2185 = vmatprep.subr.mxu0 0.0
    %v2186 = vand.u32 %v686, 4294901760
    %2187 = vmatpush1.msra.mxu0 %v2186
    %2188 = vmatprep.subr.mxu0 0.0
    %2189 = vmatpush2.msra.mxu0 0.0
    %2190 = vmatprep.subr.mxu0 0.0
    %2191 = vmatpush2.msra.mxu0 0.0
    %2192 = vmatprep.subr.mxu0 0.0
    %2193 = vmatpush2.msra.mxu0 0.0
    %2194 = vmatprep.subr.mxu0 0.0
    %2195 = vmatpush2.msra.mxu0 0.0
    %2196 = vmatprep.subr.mxu0 0.0
    %2197 = vmatpush2.msra.mxu0 0.0
    %2198 = vmatprep.subr.mxu0 0.0
    %2199 = vmatpush2.msra.mxu0 0.0
    %2200 = vmatprep.subr.mxu0 0.0
    %2201 = vmatpush2.msra.mxu0 0.0
    %2202 = vmatprep.subr.mxu0 0.0
    %2203 = vmatpush2.msra.mxu0 0.0
    %2204 = vmatprep.subr.mxu0 0.0
    %2205 = vmatpush2.msra.mxu0 0.0
    %2206 = vmatprep.subr.mxu0 0.0
    %2207 = vmatpush2.msra.mxu0 0.0
    %2208 = vmatprep.subr.mxu0 0.0
    %2209 = vmatpush2.msra.mxu0 0.0
    %2210 = vmatprep.subr.mxu0 0.0
    %2211 = vmatpush2.msra.mxu0 0.0
    %2212 = vmatprep.subr.mxu0 0.0
    %2213 = vmatpush2.msra.mxu0 0.0
    %2214 = vmatprep.subr.mxu0 0.0
    %2215 = vmatpush2.msra.mxu0 0.0
    %2216 = vmatprep.subr.mxu0 0.0
    %2217 = vmatpush2.msra.mxu0 0.0
    %2218 = vmatprep.subr.mxu0 0.0
    %2219 = vmatpush2.msra.mxu0 0.0
    %2220 = vmatprep.mubr.f32.mxu0 0.0
    %v2221 = vand.u32 %v1779, 4294901760
    %2222 = vmatmul.mubr.f32.gmra.mxu0 %v2221
    %v2223 = vpop.f32.mrf.mxu0
    %v2224 = vadd.f32 %v2152, %v2223
    %v2225 = vpop.f32.mrf.mxu0
    %2226 = vdwg.mxu0
    %v2227 = vmul.f32 %v2224, 0.032258064
    %v2228 = vadd.f32 %v2227, 1e-06
    %v2229 = vrsqrt.pop %v2228
    %v2230 = vld [vmem:[%s1] sm:$0x1]
    %v2231 = vld [vmem:[%s2] sm:$0x1]
    %v2232 = vmul.f32 %v1135, %v2229
    %v2234 = vlaneseq
    %v2235 = vshrl.u32 %v2234, 7
    %v2236 = vsub.s32 0, %v2235
    %v2237 = vrot.slane %v2230, %v2236
    %v2239 = vmul.f32 %v2237, %v2232
    %v2241 = vlaneseq
    %v2242 = vshrl.u32 %v2241, 7
    %v2243 = vsub.s32 0, %v2242
    %v2244 = vrot.slane %v2231, %v2243
    %v2246 = vadd.f32 %v2239, %v2244
    %2247 = vst [vmem:[#allocation2] sm:$0xf] %v2246
    // Predicated region
    $region22: #{tpu_custom_call.1} parent=1 // pred_check
      _
    $region23: #{tpu_custom_call.1} parent=1 // pred_check_branch
      %2249 = sbr.rel (0) target = $region25
    $region24: #{tpu_custom_call.1} parent=1 // pred_region
      %s2251 = ssub.s32 64, 64
      %2252 = vsyncadd [#allocation3], %s2251
      %s2254 = sshll.u32 [#allocation2], 4
      %s2255 = int_to_ptr.vmem [resolvable:$true] %s2254
      %2257 = dma.vmem_to_hbm [thread:$0]  %s2255, 64, %s5, [#allocation3]
    $region25: #{tpu_custom_call.1} parent=1 // pred_fallthru
      _
    // Predicated region
    $region26: #{tpu_custom_call.1} parent=1 // pred_check
      _
    $region27: #{tpu_custom_call.1} parent=1 // pred_check_branch
      %2259 = sbr.rel (0) target = $region29
    $region28: #{tpu_custom_call.1} parent=1 // pred_region
      %2260 = dma.done [#allocation3], 64
    $region29: #{tpu_custom_call.1} parent=1 // pred_fallthru
      _
    %2261 = vsyncpa [#allocation3], 1

</llo_original>
